<compile_context>
chip_gen: v6e
topology: v6e:2x2x1
jax: 0.10.0
libtpu: 0.0.40
codegen_flags: <defaults>
</compile_context>

<pallas_src>
import functools

import jax
import jax.numpy as jnp
from jax import lax
from jax.experimental import pallas as pl
from jax.experimental.pallas import tpu as pltpu

EPS = 1e-5
NEG_SLOPE = 0.2
KH = KW = 4
LANE = 128


def _round_up(v, m):
    return (v + m - 1) // m * m


def _make_kernel(stride, wa, oh, ow, ohwa, ct):
    """Build the fused conv + instance-norm + leaky-relu kernel (one batch,
    one Cout tile per grid step)."""
    inv_n = 1.0 / float(oh * ow)

    def kernel(x_ref, w_ref, m_ref, o_ref):
        # x_ref: (1, s*s, P, Cin_pad) f32  phase-decomposed reflect-padded input
        # w_ref: (KH*KW, Cin_pad, ct) bf16 per-tap weight matrices (one Cout tile)
        # m_ref: (ohwa, 1) f32             validity mask over the (OH, WA) grid
        # o_ref: (1, ohwa, ct) f32         output (junk cols j >= OW dropped outside)
        acc = jnp.zeros((ohwa, ct), jnp.float32)
        for ki in range(KH):
            for kj in range(KW):
                pr, qi = ki % stride, ki // stride
                pc, qj = kj % stride, kj // stride
                phase = pr * stride + pc
                off = qi * wa + qj
                # Contiguous 2-D slice of the flattened phase buffer; the
                # (row, col) shift of the conv tap is a single flat offset.
                xs = x_ref[0, phase, pl.ds(off, ohwa), :].astype(jnp.bfloat16)
                wt = w_ref[ki * KW + kj]                      # (Cin_pad, ct) bf16
                acc = acc + jnp.dot(xs, wt, preferred_element_type=jnp.float32)

        # InstanceNorm2d over the valid spatial positions only (two-pass,
        # biased variance), then LeakyReLU(0.2).
        m = m_ref[...]                                        # (ohwa, 1)
        mean = jnp.sum(acc * m, axis=0, keepdims=True) * inv_n
        diff = acc - mean
        var = jnp.sum(diff * diff * m, axis=0, keepdims=True) * inv_n
        yn = diff * lax.rsqrt(var + EPS)
        o_ref[0] = jnp.where(yn >= 0, yn, NEG_SLOPE * yn).astype(o_ref.dtype)

    return kernel


def block_forward(x, weight, bias, stride):
    """x: (N, Cin, H, W) NCHW; weight: (Cout, Cin, 4, 4); bias unused (cancelled
    by the affine=False InstanceNorm). Returns (N, Cout, OH, OW)."""
    del bias  # conv bias + InstanceNorm(affine=False) == no bias (exact)
    n, cin, h, w = x.shape
    cout = weight.shape[0]
    s = int(stride)

    hp, wp = h + 2, w + 2                       # reflect pad = 1 on each side
    oh = (hp - KH) // s + 1
    ow = (wp - KW) // s + 1
    ha = (hp + s - 1) // s                      # rows per stride phase
    wa = (wp + s - 1) // s                      # cols per stride phase
    ohwa = oh * wa                              # flat rows kept in the kernel
    qmax = (KH - 1) // s
    p_flat = _round_up(ohwa + qmax * wa + qmax, 8)   # padded flat phase length

    cin_pad = _round_up(cin, 8)
    cout_pad = _round_up(cout, LANE)
    ct = LANE
    n_ct = cout_pad // ct

    # ---- layout prep (cheap XLA pads/reshapes; no im2col inflation) ----
    xp = jnp.pad(x, ((0, 0), (0, 0), (1, 1), (1, 1)), mode="reflect")
    xp = jnp.transpose(xp, (0, 2, 3, 1))                           # NHWC
    xp = jnp.pad(xp, ((0, 0), (0, ha * s - hp), (0, wa * s - wp),
                      (0, cin_pad - cin)))
    xp = xp.reshape(n, ha, s, wa, s, cin_pad)
    xp = jnp.transpose(xp, (0, 2, 4, 1, 3, 5))                     # (N,s,s,HA,WA,C)
    xp = xp.reshape(n, s * s, ha * wa, cin_pad)
    xp = jnp.pad(xp, ((0, 0), (0, 0), (0, p_flat - ha * wa), (0, 0)))
    xp = xp.astype(jnp.float32)

    # per-tap weight matrices (KH*KW, Cin_pad, Cout_pad), bf16 for the MXU
    w_taps = jnp.transpose(weight, (2, 3, 1, 0)).reshape(KH * KW, cin, cout)
    w_taps = jnp.pad(w_taps, ((0, 0), (0, cin_pad - cin), (0, cout_pad - cout)))
    w_taps = w_taps.astype(jnp.bfloat16)

    # validity mask over the flattened (OH, WA) grid: columns j >= OW are junk
    col = jnp.arange(ohwa, dtype=jnp.int32) % wa
    mask = (col < ow).astype(jnp.float32).reshape(ohwa, 1)

    kernel = _make_kernel(s, wa, oh, ow, ohwa, ct)

    flops = 2 * n * ohwa * KH * KW * cin_pad * cout_pad
    bytes_accessed = (xp.size * 4 + w_taps.size * 2 + mask.size * 4
                      + n * ohwa * cout_pad * 4)

    out = pl.pallas_call(
        kernel,
        out_shape=jax.ShapeDtypeStruct((n, ohwa, cout_pad), jnp.float32),
        grid_spec=pltpu.PrefetchScalarGridSpec(
            num_scalar_prefetch=0,
            grid=(n, n_ct),
            in_specs=[
                pl.BlockSpec((1, s * s, p_flat, cin_pad),
                             lambda i, j: (i, 0, 0, 0)),
                pl.BlockSpec((KH * KW, cin_pad, ct),
                             lambda i, j: (0, 0, j)),
                pl.BlockSpec((ohwa, 1), lambda i, j: (0, 0)),
            ],
            out_specs=pl.BlockSpec((1, ohwa, ct), lambda i, j: (i, 0, j)),
        ),
        compiler_params=pltpu.CompilerParams(
            dimension_semantics=("parallel", "parallel"),
            vmem_limit_bytes=32 * 1024 * 1024,
        ),
        cost_estimate=pl.CostEstimate(
            flops=flops, transcendentals=n * cout_pad,
            bytes_accessed=bytes_accessed),
    )(xp, w_taps, mask)

    # (N, OH*WA, Cout_pad) -> (N, Cout, OH, OW); drop junk cols / pad channels.
    out = out.reshape(n, oh, wa, cout_pad)[:, :, :ow, :cout]
    return jnp.transpose(out, (0, 3, 1, 2))


def _reference(x, weight, bias, stride):
    """Pure-JAX reference: real conv (reflect pad) + bias + InstanceNorm + LeakyReLU."""
    s = int(stride)
    xp = jnp.pad(x, ((0, 0), (0, 0), (1, 1), (1, 1)), mode="reflect")
    y = lax.conv_general_dilated(
        xp, weight, window_strides=(s, s), padding="VALID",
        dimension_numbers=("NCHW", "OIHW", "NCHW"),
        precision=lax.Precision.HIGHEST)
    y = y + bias[None, :, None, None]
    mean = jnp.mean(y, axis=(2, 3), keepdims=True)
    var = jnp.mean((y - mean) ** 2, axis=(2, 3), keepdims=True)
    yn = (y - mean) * lax.rsqrt(var + EPS)
    return jnp.where(yn >= 0, yn, NEG_SLOPE * yn)


if __name__ == "__main__":
    # Small shapes consistent with the module: N=2, Cin=4, H=W=16, Cout=8, stride=2
    N, CIN, H, W = 2, 4, 16, 16
    COUT, STRIDE = 8, 2

    key = jax.random.PRNGKey(0)
    kx, kw, kb = jax.random.split(key, 3)
    x = jax.random.normal(kx, (N, CIN, H, W), dtype=jnp.float32)
    weight = jax.random.normal(kw, (COUT, CIN, KH, KW), dtype=jnp.float32) * 0.1
    bias = jax.random.normal(kb, (COUT,), dtype=jnp.float32) * 0.1

    fwd = jax.jit(block_forward, static_argnums=3)
    out = fwd(x, weight, bias, STRIDE)
    out = jax.block_until_ready(out)

    ref = _reference(x, weight, bias, STRIDE)
    assert out.shape == (N, COUT, H // STRIDE, W // STRIDE), out.shape
    err = float(jnp.max(jnp.abs(out - ref)))
    # bf16 MXU operands vs f32 HIGHEST-precision reference -> relaxed tolerance
    assert err < 3e-2, err

    print("KERNEL_OK")
</pallas_src>

<mosaic_0001>
module attributes {stable_mosaic.version = 11 : i64} {
  func.func @kernel(%arg0: i32, %arg1: i32, %arg2: memref<1x4x88x8xf32, #tpu.memory_space<vmem>>, %arg3: memref<16x8x128xbf16, #tpu.memory_space<vmem>>, %arg4: memref<72x1xf32, #tpu.memory_space<vmem>>, %arg5: memref<1x72x128xf32, #tpu.memory_space<vmem>>) attributes {dimension_semantics = [#tpu.dimension_semantics<parallel>, #tpu.dimension_semantics<parallel>], iteration_bounds = array<i64: 2, 1>, scalar_prefetch = 0 : i64, scratch_operands = 0 : i64, tpu.core_type = #tpu.core_type<tc>, window_params = [{transform_indices = @transform_0, window_bounds = array<i64: 1, 4, 88, 8>}, {transform_indices = @transform_1, window_bounds = array<i64: 16, 8, 128>}, {pipeline_mode = #tpu.pipeline_mode<synchronous>, transform_indices = @transform_2, window_bounds = array<i64: 72, 1>}, {transform_indices = @transform_3, window_bounds = array<i64: 1, 72, 128>}]} {
    %cst = arith.constant 0.000000e+00 : f32
    %0 = vector.broadcast %cst : f32 to vector<72x128xf32>
    %c0 = arith.constant 0 : index
    %c0_0 = arith.constant 0 : index
    %c0_1 = arith.constant 0 : index
    %c0_2 = arith.constant 0 : index
    %1 = vector.load %arg2[%c0, %c0_0, %c0_1, %c0_2] : memref<1x4x88x8xf32, #tpu.memory_space<vmem>>, vector<1x1x72x8xf32>
    %2 = vector.shape_cast %1 : vector<1x1x72x8xf32> to vector<72x8xf32>
    %3 = arith.truncf %2 : vector<72x8xf32> to vector<72x8xbf16>
    %c0_3 = arith.constant 0 : index
    %c0_4 = arith.constant 0 : index
    %c0_5 = arith.constant 0 : index
    %4 = vector.load %arg3[%c0_3, %c0_4, %c0_5] : memref<16x8x128xbf16, #tpu.memory_space<vmem>>, vector<1x8x128xbf16>
    %5 = vector.shape_cast %4 : vector<1x8x128xbf16> to vector<8x128xbf16>
    %cst_6 = arith.constant dense<0.000000e+00> : vector<72x128xf32>
    %6 = tpu.matmul %3, %5, %cst_6 {dimension_numbers = #tpu.dot_dimension_numbers<[1], [0], [0], [1], [0, 0, 1, 1], [], []>} : vector<72x8xbf16>, vector<8x128xbf16>, vector<72x128xf32> -> vector<72x128xf32>
    %7 = arith.addf %0, %6 : vector<72x128xf32>
    %c0_7 = arith.constant 0 : index
    %c1 = arith.constant 1 : index
    %c0_8 = arith.constant 0 : index
    %c0_9 = arith.constant 0 : index
    %8 = vector.load %arg2[%c0_7, %c1, %c0_8, %c0_9] : memref<1x4x88x8xf32, #tpu.memory_space<vmem>>, vector<1x1x72x8xf32>
    %9 = vector.shape_cast %8 : vector<1x1x72x8xf32> to vector<72x8xf32>
    %10 = arith.truncf %9 : vector<72x8xf32> to vector<72x8xbf16>
    %c1_10 = arith.constant 1 : index
    %c0_11 = arith.constant 0 : index
    %c0_12 = arith.constant 0 : index
    %11 = vector.load %arg3[%c1_10, %c0_11, %c0_12] : memref<16x8x128xbf16, #tpu.memory_space<vmem>>, vector<1x8x128xbf16>
    %12 = vector.shape_cast %11 : vector<1x8x128xbf16> to vector<8x128xbf16>
    %cst_13 = arith.constant dense<0.000000e+00> : vector<72x128xf32>
    %13 = tpu.matmul %10, %12, %cst_13 {dimension_numbers = #tpu.dot_dimension_numbers<[1], [0], [0], [1], [0, 0, 1, 1], [], []>} : vector<72x8xbf16>, vector<8x128xbf16>, vector<72x128xf32> -> vector<72x128xf32>
    %14 = arith.addf %7, %13 : vector<72x128xf32>
    %c0_14 = arith.constant 0 : index
    %c0_15 = arith.constant 0 : index
    %c1_16 = arith.constant 1 : index
    %c0_17 = arith.constant 0 : index
    %15 = vector.load %arg2[%c0_14, %c0_15, %c1_16, %c0_17] : memref<1x4x88x8xf32, #tpu.memory_space<vmem>>, vector<1x1x72x8xf32>
    %16 = vector.shape_cast %15 : vector<1x1x72x8xf32> to vector<72x8xf32>
    %17 = arith.truncf %16 : vector<72x8xf32> to vector<72x8xbf16>
    %c2 = arith.constant 2 : index
    %c0_18 = arith.constant 0 : index
    %c0_19 = arith.constant 0 : index
    %18 = vector.load %arg3[%c2, %c0_18, %c0_19] : memref<16x8x128xbf16, #tpu.memory_space<vmem>>, vector<1x8x128xbf16>
    %19 = vector.shape_cast %18 : vector<1x8x128xbf16> to vector<8x128xbf16>
    %cst_20 = arith.constant dense<0.000000e+00> : vector<72x128xf32>
    %20 = tpu.matmul %17, %19, %cst_20 {dimension_numbers = #tpu.dot_dimension_numbers<[1], [0], [0], [1], [0, 0, 1, 1], [], []>} : vector<72x8xbf16>, vector<8x128xbf16>, vector<72x128xf32> -> vector<72x128xf32>
    %21 = arith.addf %14, %20 : vector<72x128xf32>
    %c0_21 = arith.constant 0 : index
    %c1_22 = arith.constant 1 : index
    %c1_23 = arith.constant 1 : index
    %c0_24 = arith.constant 0 : index
    %22 = vector.load %arg2[%c0_21, %c1_22, %c1_23, %c0_24] : memref<1x4x88x8xf32, #tpu.memory_space<vmem>>, vector<1x1x72x8xf32>
    %23 = vector.shape_cast %22 : vector<1x1x72x8xf32> to vector<72x8xf32>
    %24 = arith.truncf %23 : vector<72x8xf32> to vector<72x8xbf16>
    %c3 = arith.constant 3 : index
    %c0_25 = arith.constant 0 : index
    %c0_26 = arith.constant 0 : index
    %25 = vector.load %arg3[%c3, %c0_25, %c0_26] : memref<16x8x128xbf16, #tpu.memory_space<vmem>>, vector<1x8x128xbf16>
    %26 = vector.shape_cast %25 : vector<1x8x128xbf16> to vector<8x128xbf16>
    %cst_27 = arith.constant dense<0.000000e+00> : vector<72x128xf32>
    %27 = tpu.matmul %24, %26, %cst_27 {dimension_numbers = #tpu.dot_dimension_numbers<[1], [0], [0], [1], [0, 0, 1, 1], [], []>} : vector<72x8xbf16>, vector<8x128xbf16>, vector<72x128xf32> -> vector<72x128xf32>
    %28 = arith.addf %21, %27 : vector<72x128xf32>
    %c0_28 = arith.constant 0 : index
    %c2_29 = arith.constant 2 : index
    %c0_30 = arith.constant 0 : index
    %c0_31 = arith.constant 0 : index
    %29 = vector.load %arg2[%c0_28, %c2_29, %c0_30, %c0_31] : memref<1x4x88x8xf32, #tpu.memory_space<vmem>>, vector<1x1x72x8xf32>
    %30 = vector.shape_cast %29 : vector<1x1x72x8xf32> to vector<72x8xf32>
    %31 = arith.truncf %30 : vector<72x8xf32> to vector<72x8xbf16>
    %c4 = arith.constant 4 : index
    %c0_32 = arith.constant 0 : index
    %c0_33 = arith.constant 0 : index
    %32 = vector.load %arg3[%c4, %c0_32, %c0_33] : memref<16x8x128xbf16, #tpu.memory_space<vmem>>, vector<1x8x128xbf16>
    %33 = vector.shape_cast %32 : vector<1x8x128xbf16> to vector<8x128xbf16>
    %cst_34 = arith.constant dense<0.000000e+00> : vector<72x128xf32>
    %34 = tpu.matmul %31, %33, %cst_34 {dimension_numbers = #tpu.dot_dimension_numbers<[1], [0], [0], [1], [0, 0, 1, 1], [], []>} : vector<72x8xbf16>, vector<8x128xbf16>, vector<72x128xf32> -> vector<72x128xf32>
    %35 = arith.addf %28, %34 : vector<72x128xf32>
    %c0_35 = arith.constant 0 : index
    %c3_36 = arith.constant 3 : index
    %c0_37 = arith.constant 0 : index
    %c0_38 = arith.constant 0 : index
    %36 = vector.load %arg2[%c0_35, %c3_36, %c0_37, %c0_38] : memref<1x4x88x8xf32, #tpu.memory_space<vmem>>, vector<1x1x72x8xf32>
    %37 = vector.shape_cast %36 : vector<1x1x72x8xf32> to vector<72x8xf32>
    %38 = arith.truncf %37 : vector<72x8xf32> to vector<72x8xbf16>
    %c5 = arith.constant 5 : index
    %c0_39 = arith.constant 0 : index
    %c0_40 = arith.constant 0 : index
    %39 = vector.load %arg3[%c5, %c0_39, %c0_40] : memref<16x8x128xbf16, #tpu.memory_space<vmem>>, vector<1x8x128xbf16>
    %40 = vector.shape_cast %39 : vector<1x8x128xbf16> to vector<8x128xbf16>
    %cst_41 = arith.constant dense<0.000000e+00> : vector<72x128xf32>
    %41 = tpu.matmul %38, %40, %cst_41 {dimension_numbers = #tpu.dot_dimension_numbers<[1], [0], [0], [1], [0, 0, 1, 1], [], []>} : vector<72x8xbf16>, vector<8x128xbf16>, vector<72x128xf32> -> vector<72x128xf32>
    %42 = arith.addf %35, %41 : vector<72x128xf32>
    %c0_42 = arith.constant 0 : index
    %c2_43 = arith.constant 2 : index
    %c1_44 = arith.constant 1 : index
    %c0_45 = arith.constant 0 : index
    %43 = vector.load %arg2[%c0_42, %c2_43, %c1_44, %c0_45] : memref<1x4x88x8xf32, #tpu.memory_space<vmem>>, vector<1x1x72x8xf32>
    %44 = vector.shape_cast %43 : vector<1x1x72x8xf32> to vector<72x8xf32>
    %45 = arith.truncf %44 : vector<72x8xf32> to vector<72x8xbf16>
    %c6 = arith.constant 6 : index
    %c0_46 = arith.constant 0 : index
    %c0_47 = arith.constant 0 : index
    %46 = vector.load %arg3[%c6, %c0_46, %c0_47] : memref<16x8x128xbf16, #tpu.memory_space<vmem>>, vector<1x8x128xbf16>
    %47 = vector.shape_cast %46 : vector<1x8x128xbf16> to vector<8x128xbf16>
    %cst_48 = arith.constant dense<0.000000e+00> : vector<72x128xf32>
    %48 = tpu.matmul %45, %47, %cst_48 {dimension_numbers = #tpu.dot_dimension_numbers<[1], [0], [0], [1], [0, 0, 1, 1], [], []>} : vector<72x8xbf16>, vector<8x128xbf16>, vector<72x128xf32> -> vector<72x128xf32>
    %49 = arith.addf %42, %48 : vector<72x128xf32>
    %c0_49 = arith.constant 0 : index
    %c3_50 = arith.constant 3 : index
    %c1_51 = arith.constant 1 : index
    %c0_52 = arith.constant 0 : index
    %50 = vector.load %arg2[%c0_49, %c3_50, %c1_51, %c0_52] : memref<1x4x88x8xf32, #tpu.memory_space<vmem>>, vector<1x1x72x8xf32>
    %51 = vector.shape_cast %50 : vector<1x1x72x8xf32> to vector<72x8xf32>
    %52 = arith.truncf %51 : vector<72x8xf32> to vector<72x8xbf16>
    %c7 = arith.constant 7 : index
    %c0_53 = arith.constant 0 : index
    %c0_54 = arith.constant 0 : index
    %53 = vector.load %arg3[%c7, %c0_53, %c0_54] : memref<16x8x128xbf16, #tpu.memory_space<vmem>>, vector<1x8x128xbf16>
    %54 = vector.shape_cast %53 : vector<1x8x128xbf16> to vector<8x128xbf16>
    %cst_55 = arith.constant dense<0.000000e+00> : vector<72x128xf32>
    %55 = tpu.matmul %52, %54, %cst_55 {dimension_numbers = #tpu.dot_dimension_numbers<[1], [0], [0], [1], [0, 0, 1, 1], [], []>} : vector<72x8xbf16>, vector<8x128xbf16>, vector<72x128xf32> -> vector<72x128xf32>
    %56 = arith.addf %49, %55 : vector<72x128xf32>
    %c0_56 = arith.constant 0 : index
    %c0_57 = arith.constant 0 : index
    %c9 = arith.constant 9 : index
    %c0_58 = arith.constant 0 : index
    %57 = vector.load %arg2[%c0_56, %c0_57, %c9, %c0_58] : memref<1x4x88x8xf32, #tpu.memory_space<vmem>>, vector<1x1x72x8xf32>
    %58 = vector.shape_cast %57 : vector<1x1x72x8xf32> to vector<72x8xf32>
    %59 = arith.truncf %58 : vector<72x8xf32> to vector<72x8xbf16>
    %c8 = arith.constant 8 : index
    %c0_59 = arith.constant 0 : index
    %c0_60 = arith.constant 0 : index
    %60 = vector.load %arg3[%c8, %c0_59, %c0_60] : memref<16x8x128xbf16, #tpu.memory_space<vmem>>, vector<1x8x128xbf16>
    %61 = vector.shape_cast %60 : vector<1x8x128xbf16> to vector<8x128xbf16>
    %cst_61 = arith.constant dense<0.000000e+00> : vector<72x128xf32>
    %62 = tpu.matmul %59, %61, %cst_61 {dimension_numbers = #tpu.dot_dimension_numbers<[1], [0], [0], [1], [0, 0, 1, 1], [], []>} : vector<72x8xbf16>, vector<8x128xbf16>, vector<72x128xf32> -> vector<72x128xf32>
    %63 = arith.addf %56, %62 : vector<72x128xf32>
    %c0_62 = arith.constant 0 : index
    %c1_63 = arith.constant 1 : index
    %c9_64 = arith.constant 9 : index
    %c0_65 = arith.constant 0 : index
    %64 = vector.load %arg2[%c0_62, %c1_63, %c9_64, %c0_65] : memref<1x4x88x8xf32, #tpu.memory_space<vmem>>, vector<1x1x72x8xf32>
    %65 = vector.shape_cast %64 : vector<1x1x72x8xf32> to vector<72x8xf32>
    %66 = arith.truncf %65 : vector<72x8xf32> to vector<72x8xbf16>
    %c9_66 = arith.constant 9 : index
    %c0_67 = arith.constant 0 : index
    %c0_68 = arith.constant 0 : index
    %67 = vector.load %arg3[%c9_66, %c0_67, %c0_68] : memref<16x8x128xbf16, #tpu.memory_space<vmem>>, vector<1x8x128xbf16>
    %68 = vector.shape_cast %67 : vector<1x8x128xbf16> to vector<8x128xbf16>
    %cst_69 = arith.constant dense<0.000000e+00> : vector<72x128xf32>
    %69 = tpu.matmul %66, %68, %cst_69 {dimension_numbers = #tpu.dot_dimension_numbers<[1], [0], [0], [1], [0, 0, 1, 1], [], []>} : vector<72x8xbf16>, vector<8x128xbf16>, vector<72x128xf32> -> vector<72x128xf32>
    %70 = arith.addf %63, %69 : vector<72x128xf32>
    %c0_70 = arith.constant 0 : index
    %c0_71 = arith.constant 0 : index
    %c10 = arith.constant 10 : index
    %c0_72 = arith.constant 0 : index
    %71 = vector.load %arg2[%c0_70, %c0_71, %c10, %c0_72] : memref<1x4x88x8xf32, #tpu.memory_space<vmem>>, vector<1x1x72x8xf32>
    %72 = vector.shape_cast %71 : vector<1x1x72x8xf32> to vector<72x8xf32>
    %73 = arith.truncf %72 : vector<72x8xf32> to vector<72x8xbf16>
    %c10_73 = arith.constant 10 : index
    %c0_74 = arith.constant 0 : index
    %c0_75 = arith.constant 0 : index
    %74 = vector.load %arg3[%c10_73, %c0_74, %c0_75] : memref<16x8x128xbf16, #tpu.memory_space<vmem>>, vector<1x8x128xbf16>
    %75 = vector.shape_cast %74 : vector<1x8x128xbf16> to vector<8x128xbf16>
    %cst_76 = arith.constant dense<0.000000e+00> : vector<72x128xf32>
    %76 = tpu.matmul %73, %75, %cst_76 {dimension_numbers = #tpu.dot_dimension_numbers<[1], [0], [0], [1], [0, 0, 1, 1], [], []>} : vector<72x8xbf16>, vector<8x128xbf16>, vector<72x128xf32> -> vector<72x128xf32>
    %77 = arith.addf %70, %76 : vector<72x128xf32>
    %c0_77 = arith.constant 0 : index
    %c1_78 = arith.constant 1 : index
    %c10_79 = arith.constant 10 : index
    %c0_80 = arith.constant 0 : index
    %78 = vector.load %arg2[%c0_77, %c1_78, %c10_79, %c0_80] : memref<1x4x88x8xf32, #tpu.memory_space<vmem>>, vector<1x1x72x8xf32>
    %79 = vector.shape_cast %78 : vector<1x1x72x8xf32> to vector<72x8xf32>
    %80 = arith.truncf %79 : vector<72x8xf32> to vector<72x8xbf16>
    %c11 = arith.constant 11 : index
    %c0_81 = arith.constant 0 : index
    %c0_82 = arith.constant 0 : index
    %81 = vector.load %arg3[%c11, %c0_81, %c0_82] : memref<16x8x128xbf16, #tpu.memory_space<vmem>>, vector<1x8x128xbf16>
    %82 = vector.shape_cast %81 : vector<1x8x128xbf16> to vector<8x128xbf16>
    %cst_83 = arith.constant dense<0.000000e+00> : vector<72x128xf32>
    %83 = tpu.matmul %80, %82, %cst_83 {dimension_numbers = #tpu.dot_dimension_numbers<[1], [0], [0], [1], [0, 0, 1, 1], [], []>} : vector<72x8xbf16>, vector<8x128xbf16>, vector<72x128xf32> -> vector<72x128xf32>
    %84 = arith.addf %77, %83 : vector<72x128xf32>
    %c0_84 = arith.constant 0 : index
    %c2_85 = arith.constant 2 : index
    %c9_86 = arith.constant 9 : index
    %c0_87 = arith.constant 0 : index
    %85 = vector.load %arg2[%c0_84, %c2_85, %c9_86, %c0_87] : memref<1x4x88x8xf32, #tpu.memory_space<vmem>>, vector<1x1x72x8xf32>
    %86 = vector.shape_cast %85 : vector<1x1x72x8xf32> to vector<72x8xf32>
    %87 = arith.truncf %86 : vector<72x8xf32> to vector<72x8xbf16>
    %c12 = arith.constant 12 : index
    %c0_88 = arith.constant 0 : index
    %c0_89 = arith.constant 0 : index
    %88 = vector.load %arg3[%c12, %c0_88, %c0_89] : memref<16x8x128xbf16, #tpu.memory_space<vmem>>, vector<1x8x128xbf16>
    %89 = vector.shape_cast %88 : vector<1x8x128xbf16> to vector<8x128xbf16>
    %cst_90 = arith.constant dense<0.000000e+00> : vector<72x128xf32>
    %90 = tpu.matmul %87, %89, %cst_90 {dimension_numbers = #tpu.dot_dimension_numbers<[1], [0], [0], [1], [0, 0, 1, 1], [], []>} : vector<72x8xbf16>, vector<8x128xbf16>, vector<72x128xf32> -> vector<72x128xf32>
    %91 = arith.addf %84, %90 : vector<72x128xf32>
    %c0_91 = arith.constant 0 : index
    %c3_92 = arith.constant 3 : index
    %c9_93 = arith.constant 9 : index
    %c0_94 = arith.constant 0 : index
    %92 = vector.load %arg2[%c0_91, %c3_92, %c9_93, %c0_94] : memref<1x4x88x8xf32, #tpu.memory_space<vmem>>, vector<1x1x72x8xf32>
    %93 = vector.shape_cast %92 : vector<1x1x72x8xf32> to vector<72x8xf32>
    %94 = arith.truncf %93 : vector<72x8xf32> to vector<72x8xbf16>
    %c13 = arith.constant 13 : index
    %c0_95 = arith.constant 0 : index
    %c0_96 = arith.constant 0 : index
    %95 = vector.load %arg3[%c13, %c0_95, %c0_96] : memref<16x8x128xbf16, #tpu.memory_space<vmem>>, vector<1x8x128xbf16>
    %96 = vector.shape_cast %95 : vector<1x8x128xbf16> to vector<8x128xbf16>
    %cst_97 = arith.constant dense<0.000000e+00> : vector<72x128xf32>
    %97 = tpu.matmul %94, %96, %cst_97 {dimension_numbers = #tpu.dot_dimension_numbers<[1], [0], [0], [1], [0, 0, 1, 1], [], []>} : vector<72x8xbf16>, vector<8x128xbf16>, vector<72x128xf32> -> vector<72x128xf32>
    %98 = arith.addf %91, %97 : vector<72x128xf32>
    %c0_98 = arith.constant 0 : index
    %c2_99 = arith.constant 2 : index
    %c10_100 = arith.constant 10 : index
    %c0_101 = arith.constant 0 : index
    %99 = vector.load %arg2[%c0_98, %c2_99, %c10_100, %c0_101] : memref<1x4x88x8xf32, #tpu.memory_space<vmem>>, vector<1x1x72x8xf32>
    %100 = vector.shape_cast %99 : vector<1x1x72x8xf32> to vector<72x8xf32>
    %101 = arith.truncf %100 : vector<72x8xf32> to vector<72x8xbf16>
    %c14 = arith.constant 14 : index
    %c0_102 = arith.constant 0 : index
    %c0_103 = arith.constant 0 : index
    %102 = vector.load %arg3[%c14, %c0_102, %c0_103] : memref<16x8x128xbf16, #tpu.memory_space<vmem>>, vector<1x8x128xbf16>
    %103 = vector.shape_cast %102 : vector<1x8x128xbf16> to vector<8x128xbf16>
    %cst_104 = arith.constant dense<0.000000e+00> : vector<72x128xf32>
    %104 = tpu.matmul %101, %103, %cst_104 {dimension_numbers = #tpu.dot_dimension_numbers<[1], [0], [0], [1], [0, 0, 1, 1], [], []>} : vector<72x8xbf16>, vector<8x128xbf16>, vector<72x128xf32> -> vector<72x128xf32>
    %105 = arith.addf %98, %104 : vector<72x128xf32>
    %c0_105 = arith.constant 0 : index
    %c3_106 = arith.constant 3 : index
    %c10_107 = arith.constant 10 : index
    %c0_108 = arith.constant 0 : index
    %106 = vector.load %arg2[%c0_105, %c3_106, %c10_107, %c0_108] : memref<1x4x88x8xf32, #tpu.memory_space<vmem>>, vector<1x1x72x8xf32>
    %107 = vector.shape_cast %106 : vector<1x1x72x8xf32> to vector<72x8xf32>
    %108 = arith.truncf %107 : vector<72x8xf32> to vector<72x8xbf16>
    %c15 = arith.constant 15 : index
    %c0_109 = arith.constant 0 : index
    %c0_110 = arith.constant 0 : index
    %109 = vector.load %arg3[%c15, %c0_109, %c0_110] : memref<16x8x128xbf16, #tpu.memory_space<vmem>>, vector<1x8x128xbf16>
    %110 = vector.shape_cast %109 : vector<1x8x128xbf16> to vector<8x128xbf16>
    %cst_111 = arith.constant dense<0.000000e+00> : vector<72x128xf32>
    %111 = tpu.matmul %108, %110, %cst_111 {dimension_numbers = #tpu.dot_dimension_numbers<[1], [0], [0], [1], [0, 0, 1, 1], [], []>} : vector<72x8xbf16>, vector<8x128xbf16>, vector<72x128xf32> -> vector<72x128xf32>
    %112 = arith.addf %105, %111 : vector<72x128xf32>
    %c0_112 = arith.constant 0 : index
    %c0_113 = arith.constant 0 : index
    %113 = vector.load %arg4[%c0_112, %c0_113] : memref<72x1xf32, #tpu.memory_space<vmem>>, vector<72x1xf32>
    %114 = vector.broadcast %113 : vector<72x1xf32> to vector<72x128xf32>
    %115 = arith.mulf %112, %114 : vector<72x128xf32>
    %cst_114 = arith.constant dense<0.000000e+00> : vector<128xf32>
    %116 = vector.multi_reduction <add>, %115, %cst_114 [0] : vector<72x128xf32> to vector<128xf32>
    %117 = vector.shape_cast %116 : vector<128xf32> to vector<1x128xf32>
    %cst_115 = arith.constant 1.562500e-02 : f32
    %118 = vector.broadcast %cst_115 : f32 to vector<1x128xf32>
    %119 = arith.mulf %117, %118 : vector<1x128xf32>
    %120 = vector.broadcast %119 : vector<1x128xf32> to vector<72x128xf32>
    %121 = arith.subf %112, %120 : vector<72x128xf32>
    %122 = arith.mulf %121, %121 : vector<72x128xf32>
    %123 = vector.broadcast %113 : vector<72x1xf32> to vector<72x128xf32>
    %124 = arith.mulf %122, %123 : vector<72x128xf32>
    %cst_116 = arith.constant dense<0.000000e+00> : vector<128xf32>
    %125 = vector.multi_reduction <add>, %124, %cst_116 [0] : vector<72x128xf32> to vector<128xf32>
    %126 = vector.shape_cast %125 : vector<128xf32> to vector<1x128xf32>
    %cst_117 = arith.constant 1.562500e-02 : f32
    %127 = vector.broadcast %cst_117 : f32 to vector<1x128xf32>
    %128 = arith.mulf %126, %127 : vector<1x128xf32>
    %cst_118 = arith.constant 9.99999974E-6 : f32
    %129 = vector.broadcast %cst_118 : f32 to vector<1x128xf32>
    %130 = arith.addf %128, %129 : vector<1x128xf32>
    %131 = math.rsqrt %130 : vector<1x128xf32>
    %132 = vector.broadcast %131 : vector<1x128xf32> to vector<72x128xf32>
    %133 = arith.mulf %121, %132 : vector<72x128xf32>
    %cst_119 = arith.constant 0.000000e+00 : f32
    %134 = vector.broadcast %cst_119 : f32 to vector<72x128xf32>
    %135 = arith.cmpf oge, %133, %134 : vector<72x128xf32>
    %cst_120 = arith.constant 2.000000e-01 : f32
    %136 = vector.broadcast %cst_120 : f32 to vector<72x128xf32>
    %137 = arith.mulf %136, %133 : vector<72x128xf32>
    %138 = arith.select %135, %133, %137 : vector<72x128xi1>, vector<72x128xf32>
    %c0_121 = arith.constant 0 : index
    %c0_122 = arith.constant 0 : index
    %c0_123 = arith.constant 0 : index
    %139 = vector.load %arg5[%c0_121, %c0_122, %c0_123] : memref<1x72x128xf32, #tpu.memory_space<vmem>>, vector<1x72x128xf32>
    %140 = vector.shape_cast %139 : vector<1x72x128xf32> to vector<72x128xf32>
    %141 = vector.shape_cast %138 : vector<72x128xf32> to vector<1x72x128xf32>
    tpu.vector_store %arg5[%c0_121, %c0_122, %c0_123], %141 {strides = array<i32>} : memref<1x72x128xf32, #tpu.memory_space<vmem>>, vector<1x72x128xf32>,
    return
  }
  func.func @transform_0(%arg0: i32, %arg1: i32) -> (i32, i32, i32, i32) {
    %c0_i32 = arith.constant 0 : i32
    %c0_i32_0 = arith.constant 0 : i32
    %c0_i32_1 = arith.constant 0 : i32
    %c0_i32_2 = arith.constant 0 : i32
    return %arg0, %c0_i32, %c0_i32_0, %c0_i32_1 : i32, i32, i32, i32
  }
  func.func @transform_1(%arg0: i32, %arg1: i32) -> (i32, i32, i32) {
    %c0_i32 = arith.constant 0 : i32
    %c0_i32_0 = arith.constant 0 : i32
    %c0_i32_1 = arith.constant 0 : i32
    return %c0_i32, %c0_i32_0, %arg1 : i32, i32, i32
  }
  func.func @transform_2(%arg0: i32, %arg1: i32) -> (i32, i32) {
    %c0_i32 = arith.constant 0 : i32
    %c0_i32_0 = arith.constant 0 : i32
    %c0_i32_1 = arith.constant 0 : i32
    return %c0_i32, %c0_i32_0 : i32, i32
  }
  func.func @transform_3(%arg0: i32, %arg1: i32) -> (i32, i32, i32) {
    %c0_i32 = arith.constant 0 : i32
    %c0_i32_0 = arith.constant 0 : i32
    return %arg0, %c0_i32, %arg1 : i32, i32, i32
  }
}

</mosaic_0001>

<llo_original>
// kernel: block_forward.1
$region0: #{block_forward.1}
  #allocation0 [shape = 'u32[]', space=smem, size = 0x4, offset = 0x4, fixed_abs, tag = 'smem constant byte address 0x4 - core index']
  #allocation1 [shape = 'u32[144,128]{1,0:T(1,128)}', space=vmem, size = 0x12000, scoped, tag = 'internal scratch']
  %s0 = inlined_call_operand.vmem [shape: f32[2,4,88,8], index: 0, kind: input, shape index: {}]
  %s1 = inlined_call_operand.vmem [shape: bf16[16,8,128], index: 1, kind: input, shape index: {}]
  %s2 = inlined_call_operand.vmem [shape: f32[72,1], index: 2, kind: input, shape index: {}]
  %s3 = inlined_call_operand.vmem [shape: f32[2,72,128], index: 3, kind: output, shape index: {}]
  %s4 = sld [smem:[#allocation0]]
  $region45: #{block_forward.1} parent=0
    _
  %s6 = ssub.s32 1, %s4
  %s7 = scalar_select 0, %s6, %s4
  loop: start=0, step=1, limit=4
  $region2: #{block_forward.1} parent=0 // loop_pre_header
    _
  $region3: #{block_forward.1} parent=0 // loop_header
    %s9 = sphi 0, %s13
    %p10 = scmp.ge.s32.totalorder %s9, 4
    %s16 = sphi 0, %s28
    %s17 = sphi 0, %s24
    %s18 = sphi 0, %s16
    %s19 = sphi 0, %s17
    %s20 = sphi 0, %s18
    %s21 = sphi 0, %s19
    %s31 = sphi 0, %s33
    %s34 = sphi 0, %s31
    %s35 = sphi 0, %s34
    %s51 = sphi 0, %s35
    %s57 = sphi 0, %s59
    %s60 = sphi 0, %s57
    %s61 = sphi 0, %s60
    %s77 = sphi 0, %s61
    %s81 = sphi 0, %s81
    %s83 = sphi 0, %s81
    %s84 = sphi 0, %s83
    %s98 = sphi 0, %s84
    %s106 = sphi 0, %s108
    %s109 = sphi 0, %s106
    %s110 = sphi 0, %s109
    %s126 = sphi 0, %s110
  $region4: #{block_forward.1} parent=0 // loop_header_branch
    %12 = sbr.rel (%p10) target = $region8
  $region5: #{block_forward.1} parent=0 // loop_body
    %s14 = ssub.s32 %s9, 1
    %s15 = ssub.s32 %s9, 2
    %s22 = sadd.s32 1, %s17
    %p23 = scmp.ge.s32.totalorder %s22, 1
    %s24 = scalar_select %p23, 0, %s22
    %s25 = sadd.s32 1, %s16
    %s26 = scalar_select %p23, %s25, %s16
    %p27 = scmp.ge.s32.totalorder %s26, 2
    %s28 = scalar_select %p27, 0, %s26
    %s29 = ssub.s32 %s16, %s28
    %p30 = scmp.eq.s32.totalorder %s29, 0
    %s32 = sadd.s32 %s31, 1
    %s33 = scalar_select %p30, %s31, %s32
    %p36 = pneg %p30
    %p37 = scmp.eq.s32.totalorder %s9, 1
    %p38 = por %p36, %p37
    %p39 = scmp.ne.s32.totalorder %s31, %s34
    %p40 = scmp.eq.s32.totalorder %s9, 0
    %p41 = por %p39, %p40
    %p42 = scmp.ne.s32.totalorder %s31, %s34
    %p43 = scmp.eq.s32.totalorder %s14, 1
    %p44 = por %p42, %p43
    %p45 = scmp.ne.s32.totalorder %s34, %s35
    %p46 = scmp.eq.s32.totalorder %s14, 0
    %p47 = por %p45, %p46
    %p48 = scmp.ne.s32.totalorder %s34, %s35
    %p49 = scmp.eq.s32.totalorder %s15, 1
    %p50 = por %p48, %p49
    %p52 = scmp.ne.s32.totalorder %s35, %s51
    %p53 = scmp.eq.s32.totalorder %s15, 0
    %p54 = por %p52, %p53
    %s55 = ssub.s32 %s17, %s24
    %p56 = scmp.eq.s32.totalorder %s55, 0
    %s58 = sadd.s32 %s57, 1
    %s59 = scalar_select %p56, %s57, %s58
    %p62 = pneg %p56
    %p63 = scmp.eq.s32.totalorder %s9, 1
    %p64 = por %p62, %p63
    %p65 = scmp.ne.s32.totalorder %s57, %s60
    %p66 = scmp.eq.s32.totalorder %s9, 0
    %p67 = por %p65, %p66
    %p68 = scmp.ne.s32.totalorder %s57, %s60
    %p69 = scmp.eq.s32.totalorder %s14, 1
    %p70 = por %p68, %p69
    %p71 = scmp.ne.s32.totalorder %s60, %s61
    %p72 = scmp.eq.s32.totalorder %s14, 0
    %p73 = por %p71, %p72
    %p74 = scmp.ne.s32.totalorder %s60, %s61
    %p75 = scmp.eq.s32.totalorder %s15, 1
    %p76 = por %p74, %p75
    %p78 = scmp.ne.s32.totalorder %s61, %s77
    %p79 = scmp.eq.s32.totalorder %s15, 0
    %p80 = por %p78, %p79
    %s82 = sadd.s32 %s81, 1
    %p85 = scmp.eq.s32.totalorder %s9, 1
    %p86 = scmp.ne.s32.totalorder %s81, %s83
    %p87 = scmp.eq.s32.totalorder %s9, 0
    %p88 = por %p86, %p87
    %p89 = scmp.ne.s32.totalorder %s81, %s83
    %p90 = scmp.eq.s32.totalorder %s14, 1
    %p91 = por %p89, %p90
    %p92 = scmp.ne.s32.totalorder %s83, %s84
    %p93 = scmp.eq.s32.totalorder %s14, 0
    %p94 = por %p92, %p93
    %p95 = scmp.ne.s32.totalorder %s83, %s84
    %p96 = scmp.eq.s32.totalorder %s15, 1
    %p97 = por %p95, %p96
    %p99 = scmp.ne.s32.totalorder %s84, %s98
    %p100 = scmp.eq.s32.totalorder %s15, 0
    %p101 = por %p99, %p100
    %s102 = ssub.s32 %s16, %s28
    %s103 = ssub.s32 %s17, %s24
    %s104 = sor.u32 %s102, %s103
    %p105 = scmp.eq.s32.totalorder %s104, 0
    %s107 = sadd.s32 %s106, 1
    %s108 = scalar_select %p105, %s106, %s107
    %p111 = pneg %p105
    %p112 = scmp.eq.s32.totalorder %s9, 1
    %p113 = por %p111, %p112
    %p114 = scmp.ne.s32.totalorder %s106, %s109
    %p115 = scmp.eq.s32.totalorder %s9, 0
    %p116 = por %p114, %p115
    %p117 = scmp.ne.s32.totalorder %s106, %s109
    %p118 = scmp.eq.s32.totalorder %s14, 1
    %p119 = por %p117, %p118
    %p120 = scmp.ne.s32.totalorder %s109, %s110
    %p121 = scmp.eq.s32.totalorder %s14, 0
    %p122 = por %p120, %p121
    %p123 = scmp.ne.s32.totalorder %s109, %s110
    %p124 = scmp.eq.s32.totalorder %s15, 1
    %p125 = por %p123, %p124
    %p127 = scmp.ne.s32.totalorder %s110, %s126
    %p128 = scmp.eq.s32.totalorder %s15, 0
    %p129 = por %p127, %p128
    %p130 = scmp.le.s32.totalorder 1, %s9
    %p131 = scmp.lt.s32.totalorder %s9, 3
    %p132 = pnand %p130, %p131
    %p133 = pneg %p132
    // Predicated region
    $region9: #{block_forward.1} parent=5 // pred_check
      _
    $region10: #{block_forward.1} parent=5 // pred_check_branch
      %135 = sbr.rel (%p132) target = $region12
    $region11: #{block_forward.1} parent=5 // pred_region
      %s136 = ssub.s32 %s9, 1
      // Predicated region
      $region13: #{block_forward.1} parent=11 // pred_check
        %p137 = pneg %p73
      $region14: #{block_forward.1} parent=11 // pred_check_branch
        %139 = sbr.rel (%p137) target = $region16
      $region15: #{block_forward.1} parent=11 // pred_region
        %p140 = scmp.lt.s32.totalorder %s19, 0
        %s141 = scalar_select %p140, %s19, 0
        %s142 = smul.addr %s141, 4
        %s143 = scalar_lea.vmem %s1, %s142
      $region16: #{block_forward.1} parent=11 // pred_fallthru
        _
      // Predicated region
      $region17: #{block_forward.1} parent=11 // pred_check
        %p144 = pneg %p94
      $region18: #{block_forward.1} parent=11 // pred_check_branch
        %146 = sbr.rel (%p144) target = $region20
      $region19: #{block_forward.1} parent=11 // pred_region
        _
      $region20: #{block_forward.1} parent=11 // pred_fallthru
        _
    $region12: #{block_forward.1} parent=5 // pred_fallthru
      _
    %p147 = scmp.lt.s32.totalorder %s9, 2
    // Predicated region
    $region21: #{block_forward.1} parent=5 // pred_check
      %p148 = pneg %p147
    $region22: #{block_forward.1} parent=5 // pred_check_branch
      %150 = sbr.rel (%p148) target = $region24
    $region23: #{block_forward.1} parent=5 // pred_region
      // Predicated region
      $region25: #{block_forward.1} parent=23 // pred_check
        %p151 = pneg %p41
      $region26: #{block_forward.1} parent=23 // pred_check_branch
        %153 = sbr.rel (%p151) target = $region28
      $region27: #{block_forward.1} parent=23 // pred_region
        %p154 = scmp.lt.s32.totalorder %s16, 1
        %s155 = scalar_select %p154, %s16, 1
        %s156 = smul.addr %s155, 44
        %s157 = smul.addr %s156, 8
        %s158 = scalar_lea.vmem %s0, %s157
      $region28: #{block_forward.1} parent=23 // pred_fallthru
        _
    $region24: #{block_forward.1} parent=5 // pred_fallthru
      _
    %p159 = scmp.le.s32.totalorder 1, %s9
    %p160 = scmp.lt.s32.totalorder %s9, 3
    %p161 = pnand %p159, %p160
    %p162 = pneg %p161
    // Predicated region
    $region29: #{block_forward.1} parent=5 // pred_check
      _
    $region30: #{block_forward.1} parent=5 // pred_check_branch
      %164 = sbr.rel (%p161) target = $region32
    $region31: #{block_forward.1} parent=5 // pred_region
      %s165 = ssub.s32 %s9, 1
      %p166 = scmp.lt.s32.totalorder %s18, 1
      %s167 = scalar_select %p166, %s18, 1
      %s168 = smul.addr %s167, 44
      %s169 = smul.addr %s168, 8
      %s170 = scalar_lea.vmem %s0, %s169
      %p171 = pneg %p47
      %p172 = pneg %p44
      %p173 = scmp.lt.s32.totalorder %s19, 0
      %s174 = scalar_select %p173, %s19, 0
      %s175 = smul.addr %s174, 4
      %s176 = scalar_lea.vmem %s1, %s175
      %p177 = pneg %p73
      %p178 = pneg %p70
      %p179 = pneg %p94
      %p180 = pneg %p91
      %p181 = pneg %p122
      %p182 = pneg %p119
      %p183 = scmp.lt.s32.totalorder %s18, 1
      %s184 = scalar_select %p183, %s18, 1
      %p185 = scmp.lt.s32.totalorder %s19, 0
      %s186 = scalar_select %p185, %s19, 0
      %s187 = smul.addr %s184, 9
      %s188 = sadd.s32 %s186, %s187
      %s189 = smul.addr %s188, 8
      %s190 = scalar_lea.vmem %s3, %s189
      %p191 = scmp.lt.s32.totalorder %s18, 1
      %s192 = scalar_select %p191, %s18, 1
      %s193 = smul.addr %s192, 44
      %s194 = smul.addr %s193, 8
      %s195 = scalar_lea.vmem %s0, %s194
      %p196 = scmp.lt.s32.totalorder %s19, 0
      %s197 = scalar_select %p196, %s19, 0
      %s198 = smul.addr %s197, 4
      %s199 = scalar_lea.vmem %s1, %s198
      %p200 = scmp.lt.s32.totalorder %s18, 1
      %s201 = scalar_select %p200, %s18, 1
      %p202 = scmp.lt.s32.totalorder %s19, 0
      %s203 = scalar_select %p202, %s19, 0
      %s204 = smul.addr %s201, 9
      %s205 = sadd.s32 %s203, %s204
      %s206 = smul.addr %s205, 8
      %s207 = scalar_lea.vmem %s3, %s206
      %v209 = vld [vmem:[%s195] sm:$0xff]
      %v210 = vld [vmem:[%s195 + $0x8] sm:$0xff]
      %v211 = vld [vmem:[%s195 + $0x10] sm:$0xff]
      %v212 = vld [vmem:[%s195 + $0x18] sm:$0xff]
      %v213 = vld [vmem:[%s195 + $0x20] sm:$0xff]
      %v214 = vld [vmem:[%s195 + $0x28] sm:$0xff]
      %v215 = vld [vmem:[%s195 + $0x30] sm:$0xff]
      %v216 = vld [vmem:[%s195 + $0x38] sm:$0xff]
      %v217 = vld [vmem:[%s195 + $0x40] sm:$0xff]
      %v218 = vpack.c.bf16 %v210, %v209
      %v219 = vpack.c.bf16 %v212, %v211
      %v220 = vpack.c.bf16 %v214, %v213
      %v221 = vpack.c.bf16 %v216, %v215
      %v222 = vpack.c.bf16 %v217, %v217
      %v223 = vld [vmem:[%s199] sm:$0xf]
      %s224 = scalar_lea.vmem %s195, 88
      %v225 = vld [vmem:[%s224] sm:$0xff]
      %v226 = vld [vmem:[%s224 + $0x8] sm:$0xff]
      %v227 = vld [vmem:[%s224 + $0x10] sm:$0xff]
      %v228 = vld [vmem:[%s224 + $0x18] sm:$0xff]
      %v229 = vld [vmem:[%s224 + $0x20] sm:$0xff]
      %v230 = vld [vmem:[%s224 + $0x28] sm:$0xff]
      %v231 = vld [vmem:[%s224 + $0x30] sm:$0xff]
      %v232 = vld [vmem:[%s224 + $0x38] sm:$0xff]
      %v233 = vld [vmem:[%s224 + $0x40] sm:$0xff]
      %v234 = vpack.c.bf16 %v226, %v225
      %v235 = vpack.c.bf16 %v228, %v227
      %v236 = vpack.c.bf16 %v230, %v229
      %v237 = vpack.c.bf16 %v232, %v231
      %v238 = vpack.c.bf16 %v233, %v233
      %s239 = scalar_lea.vmem %s199, 4
      %v240 = vld [vmem:[%s239] sm:$0xf]
      %vm241 = vcmask 64512
      %v243 = vsel %vm241, %v234, 0
      %v246 = vsel %vm241, %v235, 0
      %v249 = vsel %vm241, %v236, 0
      %v252 = vsel %vm241, %v237, 0
      %v255 = vsel %vm241, %v238, 0
      %vm257 = vcmask 1043456
      %v259 = vsel %vm257, %v240, 0
      %261 = vmatprep.subr.bf16.mxu0 0
      %262 = vmatpush1.bf16.msra.mxu0 0
      %263 = vmatprep.subr.bf16.mxu0 0
      %264 = vmatpush1.bf16.msra.mxu0 0
      %265 = vmatprep.subr.bf16.mxu0 0
      %266 = vmatpush1.bf16.msra.mxu0 0
      %267 = vmatprep.subr.bf16.mxu0 0
      %268 = vmatpush1.bf16.msra.mxu0 0
      %269 = vmatprep.subr.bf16.mxu0 0
      %270 = vmatpush1.bf16.msra.mxu0 0
      %271 = vmatprep.subr.bf16.mxu0 0
      %272 = vmatpush1.bf16.msra.mxu0 0
      %273 = vmatprep.subr.bf16.mxu0 0
      %274 = vmatpush1.bf16.msra.mxu0 0
      %275 = vmatprep.subr.bf16.mxu0 0
      %276 = vmatpush1.bf16.msra.mxu0 %v259
      %277 = vmatprep.subr.bf16.mxu0 0
      %278 = vmatpush2.bf16.msra.mxu0 0
      %279 = vmatprep.subr.bf16.mxu0 0
      %280 = vmatpush2.bf16.msra.mxu0 0
      %281 = vmatprep.subr.bf16.mxu0 0
      %282 = vmatpush2.bf16.msra.mxu0 0
      %283 = vmatprep.subr.bf16.mxu0 0
      %284 = vmatpush2.bf16.msra.mxu0 0
      %285 = vmatprep.subr.bf16.mxu0 0
      %286 = vmatpush2.bf16.msra.mxu0 0
      %287 = vmatprep.subr.bf16.mxu0 0
      %288 = vmatpush2.bf16.msra.mxu0 0
      %289 = vmatprep.subr.bf16.mxu0 0
      %290 = vmatpush2.bf16.msra.mxu0 0
      %291 = vmatprep.subr.bf16.mxu0 0
      %292 = vmatpush2.bf16.msra.mxu0 0
      %293 = vmatprep.mubr.bf16.mxu0 0
      %294 = vmatmul.mubr.bf16.gmra.mxu0 %v243
      %v295 = vpop.f32.mrf.mxu0
      %v296 = vadd.f32 0.0, %v295
      %v297 = vpop.f32.mrf.mxu0
      %v298 = vpop.f32.mrf.mxu0
      %v299 = vadd.f32 0.0, %v298
      %v300 = vpop.f32.mrf.mxu0
      %301 = vmatprep.mubr.bf16.mxu0 0
      %302 = vmatmul.mubr.bf16.gmra.mxu0 %v246
      %v303 = vpop.f32.mrf.mxu0
      %v304 = vadd.f32 0.0, %v303
      %v305 = vpop.f32.mrf.mxu0
      %v306 = vpop.f32.mrf.mxu0
      %v307 = vadd.f32 0.0, %v306
      %v308 = vpop.f32.mrf.mxu0
      %309 = vmatprep.mubr.bf16.mxu0 0
      %310 = vmatmul.mubr.bf16.gmra.mxu0 %v249
      %v311 = vpop.f32.mrf.mxu0
      %v312 = vadd.f32 0.0, %v311
      %v313 = vpop.f32.mrf.mxu0
      %v314 = vpop.f32.mrf.mxu0
      %v315 = vadd.f32 0.0, %v314
      %v316 = vpop.f32.mrf.mxu0
      %317 = vmatprep.mubr.bf16.mxu0 0
      %318 = vmatmul.mubr.bf16.gmra.mxu0 %v252
      %v319 = vpop.f32.mrf.mxu0
      %v320 = vadd.f32 0.0, %v319
      %v321 = vpop.f32.mrf.mxu0
      %v322 = vpop.f32.mrf.mxu0
      %v323 = vadd.f32 0.0, %v322
      %v324 = vpop.f32.mrf.mxu0
      %325 = vmatprep.mubr.bf16.mxu0 0
      %326 = vmatmul.mubr.bf16.gmra.mxu0 %v255
      %v327 = vpop.f32.mrf.mxu0
      %v328 = vadd.f32 0.0, %v327
      %v329 = vpop.f32.mrf.mxu0
      %v330 = vpop.f32.mrf.mxu0
      %v331 = vpop.f32.mrf.mxu0
      %332 = vdwg.mxu0
      %v334 = vsel %vm241, %v218, 0
      %v337 = vsel %vm241, %v219, 0
      %v340 = vsel %vm241, %v220, 0
      %v343 = vsel %vm241, %v221, 0
      %v346 = vsel %vm241, %v222, 0
      %v349 = vsel %vm257, %v223, 0
      %351 = vmatprep.subr.bf16.mxu0 0
      %352 = vmatpush1.bf16.msra.mxu0 0
      %353 = vmatprep.subr.bf16.mxu0 0
      %354 = vmatpush1.bf16.msra.mxu0 0
      %355 = vmatprep.subr.bf16.mxu0 0
      %356 = vmatpush1.bf16.msra.mxu0 0
      %357 = vmatprep.subr.bf16.mxu0 0
      %358 = vmatpush1.bf16.msra.mxu0 0
      %359 = vmatprep.subr.bf16.mxu0 0
      %360 = vmatpush1.bf16.msra.mxu0 0
      %361 = vmatprep.subr.bf16.mxu0 0
      %362 = vmatpush1.bf16.msra.mxu0 0
      %363 = vmatprep.subr.bf16.mxu0 0
      %364 = vmatpush1.bf16.msra.mxu0 0
      %365 = vmatprep.subr.bf16.mxu0 0
      %366 = vmatpush1.bf16.msra.mxu0 %v349
      %367 = vmatprep.subr.bf16.mxu0 0
      %368 = vmatpush2.bf16.msra.mxu0 0
      %369 = vmatprep.subr.bf16.mxu0 0
      %370 = vmatpush2.bf16.msra.mxu0 0
      %371 = vmatprep.subr.bf16.mxu0 0
      %372 = vmatpush2.bf16.msra.mxu0 0
      %373 = vmatprep.subr.bf16.mxu0 0
      %374 = vmatpush2.bf16.msra.mxu0 0
      %375 = vmatprep.subr.bf16.mxu0 0
      %376 = vmatpush2.bf16.msra.mxu0 0
      %377 = vmatprep.subr.bf16.mxu0 0
      %378 = vmatpush2.bf16.msra.mxu0 0
      %379 = vmatprep.subr.bf16.mxu0 0
      %380 = vmatpush2.bf16.msra.mxu0 0
      %381 = vmatprep.subr.bf16.mxu0 0
      %382 = vmatpush2.bf16.msra.mxu0 0
      %383 = vmatprep.mubr.bf16.mxu0 0
      %384 = vmatmul.mubr.bf16.gmra.mxu0 %v334
      %v385 = vpop.f32.mrf.mxu0
      %v386 = vadd.f32 %v296, %v385
      %v387 = vpop.f32.mrf.mxu0
      %v388 = vpop.f32.mrf.mxu0
      %v389 = vadd.f32 %v299, %v388
      %v390 = vpop.f32.mrf.mxu0
      %391 = vmatprep.mubr.bf16.mxu0 0
      %392 = vmatmul.mubr.bf16.gmra.mxu0 %v337
      %v393 = vpop.f32.mrf.mxu0
      %v394 = vadd.f32 %v304, %v393
      %v395 = vpop.f32.mrf.mxu0
      %v396 = vpop.f32.mrf.mxu0
      %v397 = vadd.f32 %v307, %v396
      %v398 = vpop.f32.mrf.mxu0
      %399 = vmatprep.mubr.bf16.mxu0 0
      %400 = vmatmul.mubr.bf16.gmra.mxu0 %v340
      %v401 = vpop.f32.mrf.mxu0
      %v402 = vadd.f32 %v312, %v401
      %v403 = vpop.f32.mrf.mxu0
      %v404 = vpop.f32.mrf.mxu0
      %v405 = vadd.f32 %v315, %v404
      %v406 = vpop.f32.mrf.mxu0
      %407 = vmatprep.mubr.bf16.mxu0 0
      %408 = vmatmul.mubr.bf16.gmra.mxu0 %v343
      %v409 = vpop.f32.mrf.mxu0
      %v410 = vadd.f32 %v320, %v409
      %v411 = vpop.f32.mrf.mxu0
      %v412 = vpop.f32.mrf.mxu0
      %v413 = vadd.f32 %v323, %v412
      %v414 = vpop.f32.mrf.mxu0
      %415 = vmatprep.mubr.bf16.mxu0 0
      %416 = vmatmul.mubr.bf16.gmra.mxu0 %v346
      %v417 = vpop.f32.mrf.mxu0
      %v418 = vadd.f32 %v328, %v417
      %v419 = vpop.f32.mrf.mxu0
      %v420 = vpop.f32.mrf.mxu0
      %v421 = vpop.f32.mrf.mxu0
      %422 = vdwg.mxu0
      %v423 = vld [vmem:[%s195 + $0x1] sm:$0xff]
      %v424 = vld [vmem:[%s195 + $0x9] sm:$0xff]
      %v425 = vld [vmem:[%s195 + $0x11] sm:$0xff]
      %v426 = vld [vmem:[%s195 + $0x19] sm:$0xff]
      %v427 = vld [vmem:[%s195 + $0x21] sm:$0xff]
      %v428 = vld [vmem:[%s195 + $0x29] sm:$0xff]
      %v429 = vld [vmem:[%s195 + $0x31] sm:$0xff]
      %v430 = vld [vmem:[%s195 + $0x39] sm:$0xff]
      %v431 = vld [vmem:[%s195 + $0x41] sm:$0xff]
      %v432 = vpack.c.bf16 %v424, %v423
      %v433 = vpack.c.bf16 %v426, %v425
      %v434 = vpack.c.bf16 %v428, %v427
      %v435 = vpack.c.bf16 %v430, %v429
      %v436 = vpack.c.bf16 %v431, %v431
      %s437 = scalar_lea.vmem %s199, 8
      %v438 = vld [vmem:[%s437] sm:$0xf]
      %v440 = vsel %vm241, %v432, 0
      %v443 = vsel %vm241, %v433, 0
      %v446 = vsel %vm241, %v434, 0
      %v449 = vsel %vm241, %v435, 0
      %v452 = vsel %vm241, %v436, 0
      %v455 = vsel %vm257, %v438, 0
      %457 = vmatprep.subr.bf16.mxu0 0
      %458 = vmatpush1.bf16.msra.mxu0 0
      %459 = vmatprep.subr.bf16.mxu0 0
      %460 = vmatpush1.bf16.msra.mxu0 0
      %461 = vmatprep.subr.bf16.mxu0 0
      %462 = vmatpush1.bf16.msra.mxu0 0
      %463 = vmatprep.subr.bf16.mxu0 0
      %464 = vmatpush1.bf16.msra.mxu0 0
      %465 = vmatprep.subr.bf16.mxu0 0
      %466 = vmatpush1.bf16.msra.mxu0 0
      %467 = vmatprep.subr.bf16.mxu0 0
      %468 = vmatpush1.bf16.msra.mxu0 0
      %469 = vmatprep.subr.bf16.mxu0 0
      %470 = vmatpush1.bf16.msra.mxu0 0
      %471 = vmatprep.subr.bf16.mxu0 0
      %472 = vmatpush1.bf16.msra.mxu0 %v455
      %473 = vmatprep.subr.bf16.mxu0 0
      %474 = vmatpush2.bf16.msra.mxu0 0
      %475 = vmatprep.subr.bf16.mxu0 0
      %476 = vmatpush2.bf16.msra.mxu0 0
      %477 = vmatprep.subr.bf16.mxu0 0
      %478 = vmatpush2.bf16.msra.mxu0 0
      %479 = vmatprep.subr.bf16.mxu0 0
      %480 = vmatpush2.bf16.msra.mxu0 0
      %481 = vmatprep.subr.bf16.mxu0 0
      %482 = vmatpush2.bf16.msra.mxu0 0
      %483 = vmatprep.subr.bf16.mxu0 0
      %484 = vmatpush2.bf16.msra.mxu0 0
      %485 = vmatprep.subr.bf16.mxu0 0
      %486 = vmatpush2.bf16.msra.mxu0 0
      %487 = vmatprep.subr.bf16.mxu0 0
      %488 = vmatpush2.bf16.msra.mxu0 0
      %489 = vmatprep.mubr.bf16.mxu0 0
      %490 = vmatmul.mubr.bf16.gmra.mxu0 %v440
      %v491 = vpop.f32.mrf.mxu0
      %v492 = vadd.f32 0.0, %v491
      %v493 = vpop.f32.mrf.mxu0
      %v494 = vpop.f32.mrf.mxu0
      %v495 = vadd.f32 0.0, %v494
      %v496 = vpop.f32.mrf.mxu0
      %497 = vmatprep.mubr.bf16.mxu0 0
      %498 = vmatmul.mubr.bf16.gmra.mxu0 %v443
      %v499 = vpop.f32.mrf.mxu0
      %v500 = vadd.f32 0.0, %v499
      %v501 = vpop.f32.mrf.mxu0
      %v502 = vpop.f32.mrf.mxu0
      %v503 = vadd.f32 0.0, %v502
      %v504 = vpop.f32.mrf.mxu0
      %505 = vmatprep.mubr.bf16.mxu0 0
      %506 = vmatmul.mubr.bf16.gmra.mxu0 %v446
      %v507 = vpop.f32.mrf.mxu0
      %v508 = vadd.f32 0.0, %v507
      %v509 = vpop.f32.mrf.mxu0
      %v510 = vpop.f32.mrf.mxu0
      %v511 = vadd.f32 0.0, %v510
      %v512 = vpop.f32.mrf.mxu0
      %513 = vmatprep.mubr.bf16.mxu0 0
      %514 = vmatmul.mubr.bf16.gmra.mxu0 %v449
      %v515 = vpop.f32.mrf.mxu0
      %v516 = vadd.f32 0.0, %v515
      %v517 = vpop.f32.mrf.mxu0
      %v518 = vpop.f32.mrf.mxu0
      %v519 = vadd.f32 0.0, %v518
      %v520 = vpop.f32.mrf.mxu0
      %521 = vmatprep.mubr.bf16.mxu0 0
      %522 = vmatmul.mubr.bf16.gmra.mxu0 %v452
      %v523 = vpop.f32.mrf.mxu0
      %v524 = vadd.f32 0.0, %v523
      %v525 = vpop.f32.mrf.mxu0
      %v526 = vpop.f32.mrf.mxu0
      %v527 = vpop.f32.mrf.mxu0
      %528 = vdwg.mxu0
      %v529 = vadd.f32 %v386, %v492
      %v530 = vadd.f32 %v389, %v495
      %v531 = vadd.f32 %v394, %v500
      %v532 = vadd.f32 %v397, %v503
      %v533 = vadd.f32 %v402, %v508
      %v534 = vadd.f32 %v405, %v511
      %v535 = vadd.f32 %v410, %v516
      %v536 = vadd.f32 %v413, %v519
      %v537 = vadd.f32 %v418, %v524
      %v538 = vld [vmem:[%s224 + $0x1] sm:$0xff]
      %v539 = vld [vmem:[%s224 + $0x9] sm:$0xff]
      %v540 = vld [vmem:[%s224 + $0x11] sm:$0xff]
      %v541 = vld [vmem:[%s224 + $0x19] sm:$0xff]
      %v542 = vld [vmem:[%s224 + $0x21] sm:$0xff]
      %v543 = vld [vmem:[%s224 + $0x29] sm:$0xff]
      %v544 = vld [vmem:[%s224 + $0x31] sm:$0xff]
      %v545 = vld [vmem:[%s224 + $0x39] sm:$0xff]
      %v546 = vld [vmem:[%s224 + $0x41] sm:$0xff]
      %v547 = vpack.c.bf16 %v539, %v538
      %v548 = vpack.c.bf16 %v541, %v540
      %v549 = vpack.c.bf16 %v543, %v542
      %v550 = vpack.c.bf16 %v545, %v544
      %v551 = vpack.c.bf16 %v546, %v546
      %s552 = scalar_lea.vmem %s199, 12
      %v553 = vld [vmem:[%s552] sm:$0xf]
      %v555 = vsel %vm241, %v547, 0
      %v558 = vsel %vm241, %v548, 0
      %v561 = vsel %vm241, %v549, 0
      %v564 = vsel %vm241, %v550, 0
      %v567 = vsel %vm241, %v551, 0
      %v570 = vsel %vm257, %v553, 0
      %572 = vmatprep.subr.bf16.mxu0 0
      %573 = vmatpush1.bf16.msra.mxu0 0
      %574 = vmatprep.subr.bf16.mxu0 0
      %575 = vmatpush1.bf16.msra.mxu0 0
      %576 = vmatprep.subr.bf16.mxu0 0
      %577 = vmatpush1.bf16.msra.mxu0 0
      %578 = vmatprep.subr.bf16.mxu0 0
      %579 = vmatpush1.bf16.msra.mxu0 0
      %580 = vmatprep.subr.bf16.mxu0 0
      %581 = vmatpush1.bf16.msra.mxu0 0
      %582 = vmatprep.subr.bf16.mxu0 0
      %583 = vmatpush1.bf16.msra.mxu0 0
      %584 = vmatprep.subr.bf16.mxu0 0
      %585 = vmatpush1.bf16.msra.mxu0 0
      %586 = vmatprep.subr.bf16.mxu0 0
      %587 = vmatpush1.bf16.msra.mxu0 %v570
      %588 = vmatprep.subr.bf16.mxu0 0
      %589 = vmatpush2.bf16.msra.mxu0 0
      %590 = vmatprep.subr.bf16.mxu0 0
      %591 = vmatpush2.bf16.msra.mxu0 0
      %592 = vmatprep.subr.bf16.mxu0 0
      %593 = vmatpush2.bf16.msra.mxu0 0
      %594 = vmatprep.subr.bf16.mxu0 0
      %595 = vmatpush2.bf16.msra.mxu0 0
      %596 = vmatprep.subr.bf16.mxu0 0
      %597 = vmatpush2.bf16.msra.mxu0 0
      %598 = vmatprep.subr.bf16.mxu0 0
      %599 = vmatpush2.bf16.msra.mxu0 0
      %600 = vmatprep.subr.bf16.mxu0 0
      %601 = vmatpush2.bf16.msra.mxu0 0
      %602 = vmatprep.subr.bf16.mxu0 0
      %603 = vmatpush2.bf16.msra.mxu0 0
      %604 = vmatprep.mubr.bf16.mxu0 0
      %605 = vmatmul.mubr.bf16.gmra.mxu0 %v555
      %v606 = vpop.f32.mrf.mxu0
      %v607 = vadd.f32 0.0, %v606
      %v608 = vpop.f32.mrf.mxu0
      %v609 = vpop.f32.mrf.mxu0
      %v610 = vadd.f32 0.0, %v609
      %v611 = vpop.f32.mrf.mxu0
      %612 = vmatprep.mubr.bf16.mxu0 0
      %613 = vmatmul.mubr.bf16.gmra.mxu0 %v558
      %v614 = vpop.f32.mrf.mxu0
      %v615 = vadd.f32 0.0, %v614
      %v616 = vpop.f32.mrf.mxu0
      %v617 = vpop.f32.mrf.mxu0
      %v618 = vadd.f32 0.0, %v617
      %v619 = vpop.f32.mrf.mxu0
      %620 = vmatprep.mubr.bf16.mxu0 0
      %621 = vmatmul.mubr.bf16.gmra.mxu0 %v561
      %v622 = vpop.f32.mrf.mxu0
      %v623 = vadd.f32 0.0, %v622
      %v624 = vpop.f32.mrf.mxu0
      %v625 = vpop.f32.mrf.mxu0
      %v626 = vadd.f32 0.0, %v625
      %v627 = vpop.f32.mrf.mxu0
      %628 = vmatprep.mubr.bf16.mxu0 0
      %629 = vmatmul.mubr.bf16.gmra.mxu0 %v564
      %v630 = vpop.f32.mrf.mxu0
      %v631 = vadd.f32 0.0, %v630
      %v632 = vpop.f32.mrf.mxu0
      %v633 = vpop.f32.mrf.mxu0
      %v634 = vadd.f32 0.0, %v633
      %v635 = vpop.f32.mrf.mxu0
      %636 = vmatprep.mubr.bf16.mxu0 0
      %637 = vmatmul.mubr.bf16.gmra.mxu0 %v567
      %v638 = vpop.f32.mrf.mxu0
      %v639 = vadd.f32 0.0, %v638
      %v640 = vpop.f32.mrf.mxu0
      %v641 = vpop.f32.mrf.mxu0
      %v642 = vpop.f32.mrf.mxu0
      %643 = vdwg.mxu0
      %v644 = vadd.f32 %v529, %v607
      %v645 = vadd.f32 %v530, %v610
      %v646 = vadd.f32 %v531, %v615
      %v647 = vadd.f32 %v532, %v618
      %v648 = vadd.f32 %v533, %v623
      %v649 = vadd.f32 %v534, %v626
      %v650 = vadd.f32 %v535, %v631
      %v651 = vadd.f32 %v536, %v634
      %v652 = vadd.f32 %v537, %v639
      %s653 = scalar_lea.vmem %s195, 176
      %v654 = vld [vmem:[%s653] sm:$0xff]
      %v655 = vld [vmem:[%s653 + $0x8] sm:$0xff]
      %v656 = vld [vmem:[%s653 + $0x10] sm:$0xff]
      %v657 = vld [vmem:[%s653 + $0x18] sm:$0xff]
      %v658 = vld [vmem:[%s653 + $0x20] sm:$0xff]
      %v659 = vld [vmem:[%s653 + $0x28] sm:$0xff]
      %v660 = vld [vmem:[%s653 + $0x30] sm:$0xff]
      %v661 = vld [vmem:[%s653 + $0x38] sm:$0xff]
      %v662 = vld [vmem:[%s653 + $0x40] sm:$0xff]
      %v663 = vpack.c.bf16 %v655, %v654
      %v664 = vpack.c.bf16 %v657, %v656
      %v665 = vpack.c.bf16 %v659, %v658
      %v666 = vpack.c.bf16 %v661, %v660
      %v667 = vpack.c.bf16 %v662, %v662
      %s668 = scalar_lea.vmem %s199, 16
      %v669 = vld [vmem:[%s668] sm:$0xf]
      %v671 = vsel %vm241, %v663, 0
      %v674 = vsel %vm241, %v664, 0
      %v677 = vsel %vm241, %v665, 0
      %v680 = vsel %vm241, %v666, 0
      %v683 = vsel %vm241, %v667, 0
      %v686 = vsel %vm257, %v669, 0
      %688 = vmatprep.subr.bf16.mxu0 0
      %689 = vmatpush1.bf16.msra.mxu0 0
      %690 = vmatprep.subr.bf16.mxu0 0
      %691 = vmatpush1.bf16.msra.mxu0 0
      %692 = vmatprep.subr.bf16.mxu0 0
      %693 = vmatpush1.bf16.msra.mxu0 0
      %694 = vmatprep.subr.bf16.mxu0 0
      %695 = vmatpush1.bf16.msra.mxu0 0
      %696 = vmatprep.subr.bf16.mxu0 0
      %697 = vmatpush1.bf16.msra.mxu0 0
      %698 = vmatprep.subr.bf16.mxu0 0
      %699 = vmatpush1.bf16.msra.mxu0 0
      %700 = vmatprep.subr.bf16.mxu0 0
      %701 = vmatpush1.bf16.msra.mxu0 0
      %702 = vmatprep.subr.bf16.mxu0 0
      %703 = vmatpush1.bf16.msra.mxu0 %v686
      %704 = vmatprep.subr.bf16.mxu0 0
      %705 = vmatpush2.bf16.msra.mxu0 0
      %706 = vmatprep.subr.bf16.mxu0 0
      %707 = vmatpush2.bf16.msra.mxu0 0
      %708 = vmatprep.subr.bf16.mxu0 0
      %709 = vmatpush2.bf16.msra.mxu0 0
      %710 = vmatprep.subr.bf16.mxu0 0
      %711 = vmatpush2.bf16.msra.mxu0 0
      %712 = vmatprep.subr.bf16.mxu0 0
      %713 = vmatpush2.bf16.msra.mxu0 0
      %714 = vmatprep.subr.bf16.mxu0 0
      %715 = vmatpush2.bf16.msra.mxu0 0
      %716 = vmatprep.subr.bf16.mxu0 0
      %717 = vmatpush2.bf16.msra.mxu0 0
      %718 = vmatprep.subr.bf16.mxu0 0
      %719 = vmatpush2.bf16.msra.mxu0 0
      %720 = vmatprep.mubr.bf16.mxu0 0
      %721 = vmatmul.mubr.bf16.gmra.mxu0 %v671
      %v722 = vpop.f32.mrf.mxu0
      %v723 = vadd.f32 0.0, %v722
      %v724 = vpop.f32.mrf.mxu0
      %v725 = vpop.f32.mrf.mxu0
      %v726 = vadd.f32 0.0, %v725
      %v727 = vpop.f32.mrf.mxu0
      %728 = vmatprep.mubr.bf16.mxu0 0
      %729 = vmatmul.mubr.bf16.gmra.mxu0 %v674
      %v730 = vpop.f32.mrf.mxu0
      %v731 = vadd.f32 0.0, %v730
      %v732 = vpop.f32.mrf.mxu0
      %v733 = vpop.f32.mrf.mxu0
      %v734 = vadd.f32 0.0, %v733
      %v735 = vpop.f32.mrf.mxu0
      %736 = vmatprep.mubr.bf16.mxu0 0
      %737 = vmatmul.mubr.bf16.gmra.mxu0 %v677
      %v738 = vpop.f32.mrf.mxu0
      %v739 = vadd.f32 0.0, %v738
      %v740 = vpop.f32.mrf.mxu0
      %v741 = vpop.f32.mrf.mxu0
      %v742 = vadd.f32 0.0, %v741
      %v743 = vpop.f32.mrf.mxu0
      %744 = vmatprep.mubr.bf16.mxu0 0
      %745 = vmatmul.mubr.bf16.gmra.mxu0 %v680
      %v746 = vpop.f32.mrf.mxu0
      %v747 = vadd.f32 0.0, %v746
      %v748 = vpop.f32.mrf.mxu0
      %v749 = vpop.f32.mrf.mxu0
      %v750 = vadd.f32 0.0, %v749
      %v751 = vpop.f32.mrf.mxu0
      %752 = vmatprep.mubr.bf16.mxu0 0
      %753 = vmatmul.mubr.bf16.gmra.mxu0 %v683
      %v754 = vpop.f32.mrf.mxu0
      %v755 = vadd.f32 0.0, %v754
      %v756 = vpop.f32.mrf.mxu0
      %v757 = vpop.f32.mrf.mxu0
      %v758 = vpop.f32.mrf.mxu0
      %759 = vdwg.mxu0
      %v760 = vadd.f32 %v644, %v723
      %v761 = vadd.f32 %v645, %v726
      %v762 = vadd.f32 %v646, %v731
      %v763 = vadd.f32 %v647, %v734
      %v764 = vadd.f32 %v648, %v739
      %v765 = vadd.f32 %v649, %v742
      %v766 = vadd.f32 %v650, %v747
      %v767 = vadd.f32 %v651, %v750
      %v768 = vadd.f32 %v652, %v755
      %s769 = scalar_lea.vmem %s195, 264
      %v770 = vld [vmem:[%s769] sm:$0xff]
      %v771 = vld [vmem:[%s769 + $0x8] sm:$0xff]
      %v772 = vld [vmem:[%s769 + $0x10] sm:$0xff]
      %v773 = vld [vmem:[%s769 + $0x18] sm:$0xff]
      %v774 = vld [vmem:[%s769 + $0x20] sm:$0xff]
      %v775 = vld [vmem:[%s769 + $0x28] sm:$0xff]
      %v776 = vld [vmem:[%s769 + $0x30] sm:$0xff]
      %v777 = vld [vmem:[%s769 + $0x38] sm:$0xff]
      %v778 = vld [vmem:[%s769 + $0x40] sm:$0xff]
      %v779 = vpack.c.bf16 %v771, %v770
      %v780 = vpack.c.bf16 %v773, %v772
      %v781 = vpack.c.bf16 %v775, %v774
      %v782 = vpack.c.bf16 %v777, %v776
      %v783 = vpack.c.bf16 %v778, %v778
      %s784 = scalar_lea.vmem %s199, 20
      %v785 = vld [vmem:[%s784] sm:$0xf]
      %v787 = vsel %vm241, %v779, 0
      %v790 = vsel %vm241, %v780, 0
      %v793 = vsel %vm241, %v781, 0
      %v796 = vsel %vm241, %v782, 0
      %v799 = vsel %vm241, %v783, 0
      %v802 = vsel %vm257, %v785, 0
      %804 = vmatprep.subr.bf16.mxu0 0
      %805 = vmatpush1.bf16.msra.mxu0 0
      %806 = vmatprep.subr.bf16.mxu0 0
      %807 = vmatpush1.bf16.msra.mxu0 0
      %808 = vmatprep.subr.bf16.mxu0 0
      %809 = vmatpush1.bf16.msra.mxu0 0
      %810 = vmatprep.subr.bf16.mxu0 0
      %811 = vmatpush1.bf16.msra.mxu0 0
      %812 = vmatprep.subr.bf16.mxu0 0
      %813 = vmatpush1.bf16.msra.mxu0 0
      %814 = vmatprep.subr.bf16.mxu0 0
      %815 = vmatpush1.bf16.msra.mxu0 0
      %816 = vmatprep.subr.bf16.mxu0 0
      %817 = vmatpush1.bf16.msra.mxu0 0
      %818 = vmatprep.subr.bf16.mxu0 0
      %819 = vmatpush1.bf16.msra.mxu0 %v802
      %820 = vmatprep.subr.bf16.mxu0 0
      %821 = vmatpush2.bf16.msra.mxu0 0
      %822 = vmatprep.subr.bf16.mxu0 0
      %823 = vmatpush2.bf16.msra.mxu0 0
      %824 = vmatprep.subr.bf16.mxu0 0
      %825 = vmatpush2.bf16.msra.mxu0 0
      %826 = vmatprep.subr.bf16.mxu0 0
      %827 = vmatpush2.bf16.msra.mxu0 0
      %828 = vmatprep.subr.bf16.mxu0 0
      %829 = vmatpush2.bf16.msra.mxu0 0
      %830 = vmatprep.subr.bf16.mxu0 0
      %831 = vmatpush2.bf16.msra.mxu0 0
      %832 = vmatprep.subr.bf16.mxu0 0
      %833 = vmatpush2.bf16.msra.mxu0 0
      %834 = vmatprep.subr.bf16.mxu0 0
      %835 = vmatpush2.bf16.msra.mxu0 0
      %836 = vmatprep.mubr.bf16.mxu0 0
      %837 = vmatmul.mubr.bf16.gmra.mxu0 %v787
      %v838 = vpop.f32.mrf.mxu0
      %v839 = vadd.f32 0.0, %v838
      %v840 = vpop.f32.mrf.mxu0
      %v841 = vpop.f32.mrf.mxu0
      %v842 = vadd.f32 0.0, %v841
      %v843 = vpop.f32.mrf.mxu0
      %844 = vmatprep.mubr.bf16.mxu0 0
      %845 = vmatmul.mubr.bf16.gmra.mxu0 %v790
      %v846 = vpop.f32.mrf.mxu0
      %v847 = vadd.f32 0.0, %v846
      %v848 = vpop.f32.mrf.mxu0
      %v849 = vpop.f32.mrf.mxu0
      %v850 = vadd.f32 0.0, %v849
      %v851 = vpop.f32.mrf.mxu0
      %852 = vmatprep.mubr.bf16.mxu0 0
      %853 = vmatmul.mubr.bf16.gmra.mxu0 %v793
      %v854 = vpop.f32.mrf.mxu0
      %v855 = vadd.f32 0.0, %v854
      %v856 = vpop.f32.mrf.mxu0
      %v857 = vpop.f32.mrf.mxu0
      %v858 = vadd.f32 0.0, %v857
      %v859 = vpop.f32.mrf.mxu0
      %860 = vmatprep.mubr.bf16.mxu0 0
      %861 = vmatmul.mubr.bf16.gmra.mxu0 %v796
      %v862 = vpop.f32.mrf.mxu0
      %v863 = vadd.f32 0.0, %v862
      %v864 = vpop.f32.mrf.mxu0
      %v865 = vpop.f32.mrf.mxu0
      %v866 = vadd.f32 0.0, %v865
      %v867 = vpop.f32.mrf.mxu0
      %868 = vmatprep.mubr.bf16.mxu0 0
      %869 = vmatmul.mubr.bf16.gmra.mxu0 %v799
      %v870 = vpop.f32.mrf.mxu0
      %v871 = vadd.f32 0.0, %v870
      %v872 = vpop.f32.mrf.mxu0
      %v873 = vpop.f32.mrf.mxu0
      %v874 = vpop.f32.mrf.mxu0
      %875 = vdwg.mxu0
      %v876 = vadd.f32 %v760, %v839
      %v877 = vadd.f32 %v761, %v842
      %v878 = vadd.f32 %v762, %v847
      %v879 = vadd.f32 %v763, %v850
      %v880 = vadd.f32 %v764, %v855
      %v881 = vadd.f32 %v765, %v858
      %v882 = vadd.f32 %v766, %v863
      %v883 = vadd.f32 %v767, %v866
      %v884 = vadd.f32 %v768, %v871
      %v885 = vld [vmem:[%s653 + $0x1] sm:$0xff]
      %v886 = vld [vmem:[%s653 + $0x9] sm:$0xff]
      %v887 = vld [vmem:[%s653 + $0x11] sm:$0xff]
      %v888 = vld [vmem:[%s653 + $0x19] sm:$0xff]
      %v889 = vld [vmem:[%s653 + $0x21] sm:$0xff]
      %v890 = vld [vmem:[%s653 + $0x29] sm:$0xff]
      %v891 = vld [vmem:[%s653 + $0x31] sm:$0xff]
      %v892 = vld [vmem:[%s653 + $0x39] sm:$0xff]
      %v893 = vld [vmem:[%s653 + $0x41] sm:$0xff]
      %v894 = vpack.c.bf16 %v886, %v885
      %v895 = vpack.c.bf16 %v888, %v887
      %v896 = vpack.c.bf16 %v890, %v889
      %v897 = vpack.c.bf16 %v892, %v891
      %v898 = vpack.c.bf16 %v893, %v893
      %s899 = scalar_lea.vmem %s199, 24
      %v900 = vld [vmem:[%s899] sm:$0xf]
      %v902 = vsel %vm241, %v894, 0
      %v905 = vsel %vm241, %v895, 0
      %v908 = vsel %vm241, %v896, 0
      %v911 = vsel %vm241, %v897, 0
      %v914 = vsel %vm241, %v898, 0
      %v917 = vsel %vm257, %v900, 0
      %919 = vmatprep.subr.bf16.mxu0 0
      %920 = vmatpush1.bf16.msra.mxu0 0
      %921 = vmatprep.subr.bf16.mxu0 0
      %922 = vmatpush1.bf16.msra.mxu0 0
      %923 = vmatprep.subr.bf16.mxu0 0
      %924 = vmatpush1.bf16.msra.mxu0 0
      %925 = vmatprep.subr.bf16.mxu0 0
      %926 = vmatpush1.bf16.msra.mxu0 0
      %927 = vmatprep.subr.bf16.mxu0 0
      %928 = vmatpush1.bf16.msra.mxu0 0
      %929 = vmatprep.subr.bf16.mxu0 0
      %930 = vmatpush1.bf16.msra.mxu0 0
      %931 = vmatprep.subr.bf16.mxu0 0
      %932 = vmatpush1.bf16.msra.mxu0 0
      %933 = vmatprep.subr.bf16.mxu0 0
      %934 = vmatpush1.bf16.msra.mxu0 %v917
      %935 = vmatprep.subr.bf16.mxu0 0
      %936 = vmatpush2.bf16.msra.mxu0 0
      %937 = vmatprep.subr.bf16.mxu0 0
      %938 = vmatpush2.bf16.msra.mxu0 0
      %939 = vmatprep.subr.bf16.mxu0 0
      %940 = vmatpush2.bf16.msra.mxu0 0
      %941 = vmatprep.subr.bf16.mxu0 0
      %942 = vmatpush2.bf16.msra.mxu0 0
      %943 = vmatprep.subr.bf16.mxu0 0
      %944 = vmatpush2.bf16.msra.mxu0 0
      %945 = vmatprep.subr.bf16.mxu0 0
      %946 = vmatpush2.bf16.msra.mxu0 0
      %947 = vmatprep.subr.bf16.mxu0 0
      %948 = vmatpush2.bf16.msra.mxu0 0
      %949 = vmatprep.subr.bf16.mxu0 0
      %950 = vmatpush2.bf16.msra.mxu0 0
      %951 = vmatprep.mubr.bf16.mxu0 0
      %952 = vmatmul.mubr.bf16.gmra.mxu0 %v902
      %v953 = vpop.f32.mrf.mxu0
      %v954 = vadd.f32 0.0, %v953
      %v955 = vpop.f32.mrf.mxu0
      %v956 = vpop.f32.mrf.mxu0
      %v957 = vadd.f32 0.0, %v956
      %v958 = vpop.f32.mrf.mxu0
      %959 = vmatprep.mubr.bf16.mxu0 0
      %960 = vmatmul.mubr.bf16.gmra.mxu0 %v905
      %v961 = vpop.f32.mrf.mxu0
      %v962 = vadd.f32 0.0, %v961
      %v963 = vpop.f32.mrf.mxu0
      %v964 = vpop.f32.mrf.mxu0
      %v965 = vadd.f32 0.0, %v964
      %v966 = vpop.f32.mrf.mxu0
      %967 = vmatprep.mubr.bf16.mxu0 0
      %968 = vmatmul.mubr.bf16.gmra.mxu0 %v908
      %v969 = vpop.f32.mrf.mxu0
      %v970 = vadd.f32 0.0, %v969
      %v971 = vpop.f32.mrf.mxu0
      %v972 = vpop.f32.mrf.mxu0
      %v973 = vadd.f32 0.0, %v972
      %v974 = vpop.f32.mrf.mxu0
      %975 = vmatprep.mubr.bf16.mxu0 0
      %976 = vmatmul.mubr.bf16.gmra.mxu0 %v911
      %v977 = vpop.f32.mrf.mxu0
      %v978 = vadd.f32 0.0, %v977
      %v979 = vpop.f32.mrf.mxu0
      %v980 = vpop.f32.mrf.mxu0
      %v981 = vadd.f32 0.0, %v980
      %v982 = vpop.f32.mrf.mxu0
      %983 = vmatprep.mubr.bf16.mxu0 0
      %984 = vmatmul.mubr.bf16.gmra.mxu0 %v914
      %v985 = vpop.f32.mrf.mxu0
      %v986 = vadd.f32 0.0, %v985
      %v987 = vpop.f32.mrf.mxu0
      %v988 = vpop.f32.mrf.mxu0
      %v989 = vpop.f32.mrf.mxu0
      %990 = vdwg.mxu0
      %v991 = vadd.f32 %v876, %v954
      %v992 = vadd.f32 %v877, %v957
      %v993 = vadd.f32 %v878, %v962
      %v994 = vadd.f32 %v879, %v965
      %v995 = vadd.f32 %v880, %v970
      %v996 = vadd.f32 %v881, %v973
      %v997 = vadd.f32 %v882, %v978
      %v998 = vadd.f32 %v883, %v981
      %v999 = vadd.f32 %v884, %v986
      %v1000 = vld [vmem:[%s769 + $0x1] sm:$0xff]
      %v1001 = vld [vmem:[%s769 + $0x9] sm:$0xff]
      %v1002 = vld [vmem:[%s769 + $0x11] sm:$0xff]
      %v1003 = vld [vmem:[%s769 + $0x19] sm:$0xff]
      %v1004 = vld [vmem:[%s769 + $0x21] sm:$0xff]
      %v1005 = vld [vmem:[%s769 + $0x29] sm:$0xff]
      %v1006 = vld [vmem:[%s769 + $0x31] sm:$0xff]
      %v1007 = vld [vmem:[%s769 + $0x39] sm:$0xff]
      %v1008 = vld [vmem:[%s769 + $0x41] sm:$0xff]
      %v1009 = vpack.c.bf16 %v1001, %v1000
      %v1010 = vpack.c.bf16 %v1003, %v1002
      %v1011 = vpack.c.bf16 %v1005, %v1004
      %v1012 = vpack.c.bf16 %v1007, %v1006
      %v1013 = vpack.c.bf16 %v1008, %v1008
      %s1014 = scalar_lea.vmem %s199, 28
      %v1015 = vld [vmem:[%s1014] sm:$0xf]
      %v1017 = vsel %vm241, %v1009, 0
      %v1020 = vsel %vm241, %v1010, 0
      %v1023 = vsel %vm241, %v1011, 0
      %v1026 = vsel %vm241, %v1012, 0
      %v1029 = vsel %vm241, %v1013, 0
      %v1032 = vsel %vm257, %v1015, 0
      %1034 = vmatprep.subr.bf16.mxu0 0
      %1035 = vmatpush1.bf16.msra.mxu0 0
      %1036 = vmatprep.subr.bf16.mxu0 0
      %1037 = vmatpush1.bf16.msra.mxu0 0
      %1038 = vmatprep.subr.bf16.mxu0 0
      %1039 = vmatpush1.bf16.msra.mxu0 0
      %1040 = vmatprep.subr.bf16.mxu0 0
      %1041 = vmatpush1.bf16.msra.mxu0 0
      %1042 = vmatprep.subr.bf16.mxu0 0
      %1043 = vmatpush1.bf16.msra.mxu0 0
      %1044 = vmatprep.subr.bf16.mxu0 0
      %1045 = vmatpush1.bf16.msra.mxu0 0
      %1046 = vmatprep.subr.bf16.mxu0 0
      %1047 = vmatpush1.bf16.msra.mxu0 0
      %1048 = vmatprep.subr.bf16.mxu0 0
      %1049 = vmatpush1.bf16.msra.mxu0 %v1032
      %1050 = vmatprep.subr.bf16.mxu0 0
      %1051 = vmatpush2.bf16.msra.mxu0 0
      %1052 = vmatprep.subr.bf16.mxu0 0
      %1053 = vmatpush2.bf16.msra.mxu0 0
      %1054 = vmatprep.subr.bf16.mxu0 0
      %1055 = vmatpush2.bf16.msra.mxu0 0
      %1056 = vmatprep.subr.bf16.mxu0 0
      %1057 = vmatpush2.bf16.msra.mxu0 0
      %1058 = vmatprep.subr.bf16.mxu0 0
      %1059 = vmatpush2.bf16.msra.mxu0 0
      %1060 = vmatprep.subr.bf16.mxu0 0
      %1061 = vmatpush2.bf16.msra.mxu0 0
      %1062 = vmatprep.subr.bf16.mxu0 0
      %1063 = vmatpush2.bf16.msra.mxu0 0
      %1064 = vmatprep.subr.bf16.mxu0 0
      %1065 = vmatpush2.bf16.msra.mxu0 0
      %1066 = vmatprep.mubr.bf16.mxu0 0
      %1067 = vmatmul.mubr.bf16.gmra.mxu0 %v1017
      %v1068 = vpop.f32.mrf.mxu0
      %v1069 = vadd.f32 0.0, %v1068
      %v1070 = vpop.f32.mrf.mxu0
      %v1071 = vpop.f32.mrf.mxu0
      %v1072 = vadd.f32 0.0, %v1071
      %v1073 = vpop.f32.mrf.mxu0
      %1074 = vmatprep.mubr.bf16.mxu0 0
      %1075 = vmatmul.mubr.bf16.gmra.mxu0 %v1020
      %v1076 = vpop.f32.mrf.mxu0
      %v1077 = vadd.f32 0.0, %v1076
      %v1078 = vpop.f32.mrf.mxu0
      %v1079 = vpop.f32.mrf.mxu0
      %v1080 = vadd.f32 0.0, %v1079
      %v1081 = vpop.f32.mrf.mxu0
      %1082 = vmatprep.mubr.bf16.mxu0 0
      %1083 = vmatmul.mubr.bf16.gmra.mxu0 %v1023
      %v1084 = vpop.f32.mrf.mxu0
      %v1085 = vadd.f32 0.0, %v1084
      %v1086 = vpop.f32.mrf.mxu0
      %v1087 = vpop.f32.mrf.mxu0
      %v1088 = vadd.f32 0.0, %v1087
      %v1089 = vpop.f32.mrf.mxu0
      %1090 = vmatprep.mubr.bf16.mxu0 0
      %1091 = vmatmul.mubr.bf16.gmra.mxu0 %v1026
      %v1092 = vpop.f32.mrf.mxu0
      %v1093 = vadd.f32 0.0, %v1092
      %v1094 = vpop.f32.mrf.mxu0
      %v1095 = vpop.f32.mrf.mxu0
      %v1096 = vadd.f32 0.0, %v1095
      %v1097 = vpop.f32.mrf.mxu0
      %1098 = vmatprep.mubr.bf16.mxu0 0
      %1099 = vmatmul.mubr.bf16.gmra.mxu0 %v1029
      %v1100 = vpop.f32.mrf.mxu0
      %v1101 = vadd.f32 0.0, %v1100
      %v1102 = vpop.f32.mrf.mxu0
      %v1103 = vpop.f32.mrf.mxu0
      %v1104 = vpop.f32.mrf.mxu0
      %1105 = vdwg.mxu0
      %v1106 = vadd.f32 %v991, %v1069
      %v1107 = vadd.f32 %v992, %v1072
      %v1108 = vadd.f32 %v993, %v1077
      %v1109 = vadd.f32 %v994, %v1080
      %v1110 = vadd.f32 %v995, %v1085
      %v1111 = vadd.f32 %v996, %v1088
      %v1112 = vadd.f32 %v997, %v1093
      %v1113 = vadd.f32 %v998, %v1096
      %v1114 = vadd.f32 %v999, %v1101
      %v1115 = vld [vmem:[%s195 + $0x9] sm:$0xff]
      %v1116 = vld [vmem:[%s195 + $0x11] sm:$0xff]
      %v1117 = vld [vmem:[%s195 + $0x19] sm:$0xff]
      %v1118 = vld [vmem:[%s195 + $0x21] sm:$0xff]
      %v1119 = vld [vmem:[%s195 + $0x29] sm:$0xff]
      %v1120 = vld [vmem:[%s195 + $0x31] sm:$0xff]
      %v1121 = vld [vmem:[%s195 + $0x39] sm:$0xff]
      %v1122 = vld [vmem:[%s195 + $0x41] sm:$0xff]
      %v1123 = vld [vmem:[%s195 + $0x49] sm:$0xff]
      %v1124 = vpack.c.bf16 %v1116, %v1115
      %v1125 = vpack.c.bf16 %v1118, %v1117
      %v1126 = vpack.c.bf16 %v1120, %v1119
      %v1127 = vpack.c.bf16 %v1122, %v1121
      %v1128 = vpack.c.bf16 %v1123, %v1123
      %s1129 = scalar_lea.vmem %s199, 32
      %v1130 = vld [vmem:[%s1129] sm:$0xf]
      %v1132 = vsel %vm241, %v1124, 0
      %v1135 = vsel %vm241, %v1125, 0
      %v1138 = vsel %vm241, %v1126, 0
      %v1141 = vsel %vm241, %v1127, 0
      %v1144 = vsel %vm241, %v1128, 0
      %v1147 = vsel %vm257, %v1130, 0
      %1149 = vmatprep.subr.bf16.mxu0 0
      %1150 = vmatpush1.bf16.msra.mxu0 0
      %1151 = vmatprep.subr.bf16.mxu0 0
      %1152 = vmatpush1.bf16.msra.mxu0 0
      %1153 = vmatprep.subr.bf16.mxu0 0
      %1154 = vmatpush1.bf16.msra.mxu0 0
      %1155 = vmatprep.subr.bf16.mxu0 0
      %1156 = vmatpush1.bf16.msra.mxu0 0
      %1157 = vmatprep.subr.bf16.mxu0 0
      %1158 = vmatpush1.bf16.msra.mxu0 0
      %1159 = vmatprep.subr.bf16.mxu0 0
      %1160 = vmatpush1.bf16.msra.mxu0 0
      %1161 = vmatprep.subr.bf16.mxu0 0
      %1162 = vmatpush1.bf16.msra.mxu0 0
      %1163 = vmatprep.subr.bf16.mxu0 0
      %1164 = vmatpush1.bf16.msra.mxu0 %v1147
      %1165 = vmatprep.subr.bf16.mxu0 0
      %1166 = vmatpush2.bf16.msra.mxu0 0
      %1167 = vmatprep.subr.bf16.mxu0 0
      %1168 = vmatpush2.bf16.msra.mxu0 0
      %1169 = vmatprep.subr.bf16.mxu0 0
      %1170 = vmatpush2.bf16.msra.mxu0 0
      %1171 = vmatprep.subr.bf16.mxu0 0
      %1172 = vmatpush2.bf16.msra.mxu0 0
      %1173 = vmatprep.subr.bf16.mxu0 0
      %1174 = vmatpush2.bf16.msra.mxu0 0
      %1175 = vmatprep.subr.bf16.mxu0 0
      %1176 = vmatpush2.bf16.msra.mxu0 0
      %1177 = vmatprep.subr.bf16.mxu0 0
      %1178 = vmatpush2.bf16.msra.mxu0 0
      %1179 = vmatprep.subr.bf16.mxu0 0
      %1180 = vmatpush2.bf16.msra.mxu0 0
      %1181 = vmatprep.mubr.bf16.mxu0 0
      %1182 = vmatmul.mubr.bf16.gmra.mxu0 %v1132
      %v1183 = vpop.f32.mrf.mxu0
      %v1184 = vadd.f32 0.0, %v1183
      %v1185 = vpop.f32.mrf.mxu0
      %v1186 = vpop.f32.mrf.mxu0
      %v1187 = vadd.f32 0.0, %v1186
      %v1188 = vpop.f32.mrf.mxu0
      %1189 = vmatprep.mubr.bf16.mxu0 0
      %1190 = vmatmul.mubr.bf16.gmra.mxu0 %v1135
      %v1191 = vpop.f32.mrf.mxu0
      %v1192 = vadd.f32 0.0, %v1191
      %v1193 = vpop.f32.mrf.mxu0
      %v1194 = vpop.f32.mrf.mxu0
      %v1195 = vadd.f32 0.0, %v1194
      %v1196 = vpop.f32.mrf.mxu0
      %1197 = vmatprep.mubr.bf16.mxu0 0
      %1198 = vmatmul.mubr.bf16.gmra.mxu0 %v1138
      %v1199 = vpop.f32.mrf.mxu0
      %v1200 = vadd.f32 0.0, %v1199
      %v1201 = vpop.f32.mrf.mxu0
      %v1202 = vpop.f32.mrf.mxu0
      %v1203 = vadd.f32 0.0, %v1202
      %v1204 = vpop.f32.mrf.mxu0
      %1205 = vmatprep.mubr.bf16.mxu0 0
      %1206 = vmatmul.mubr.bf16.gmra.mxu0 %v1141
      %v1207 = vpop.f32.mrf.mxu0
      %v1208 = vadd.f32 0.0, %v1207
      %v1209 = vpop.f32.mrf.mxu0
      %v1210 = vpop.f32.mrf.mxu0
      %v1211 = vadd.f32 0.0, %v1210
      %v1212 = vpop.f32.mrf.mxu0
      %1213 = vmatprep.mubr.bf16.mxu0 0
      %1214 = vmatmul.mubr.bf16.gmra.mxu0 %v1144
      %v1215 = vpop.f32.mrf.mxu0
      %v1216 = vadd.f32 0.0, %v1215
      %v1217 = vpop.f32.mrf.mxu0
      %v1218 = vpop.f32.mrf.mxu0
      %v1219 = vpop.f32.mrf.mxu0
      %1220 = vdwg.mxu0
      %v1221 = vadd.f32 %v1106, %v1184
      %v1222 = vadd.f32 %v1107, %v1187
      %v1223 = vadd.f32 %v1108, %v1192
      %v1224 = vadd.f32 %v1109, %v1195
      %v1225 = vadd.f32 %v1110, %v1200
      %v1226 = vadd.f32 %v1111, %v1203
      %v1227 = vadd.f32 %v1112, %v1208
      %v1228 = vadd.f32 %v1113, %v1211
      %v1229 = vadd.f32 %v1114, %v1216
      %v1230 = vld [vmem:[%s224 + $0x9] sm:$0xff]
      %v1231 = vld [vmem:[%s224 + $0x11] sm:$0xff]
      %v1232 = vld [vmem:[%s224 + $0x19] sm:$0xff]
      %v1233 = vld [vmem:[%s224 + $0x21] sm:$0xff]
      %v1234 = vld [vmem:[%s224 + $0x29] sm:$0xff]
      %v1235 = vld [vmem:[%s224 + $0x31] sm:$0xff]
      %v1236 = vld [vmem:[%s224 + $0x39] sm:$0xff]
      %v1237 = vld [vmem:[%s224 + $0x41] sm:$0xff]
      %v1238 = vld [vmem:[%s224 + $0x49] sm:$0xff]
      %v1239 = vpack.c.bf16 %v1231, %v1230
      %v1240 = vpack.c.bf16 %v1233, %v1232
      %v1241 = vpack.c.bf16 %v1235, %v1234
      %v1242 = vpack.c.bf16 %v1237, %v1236
      %v1243 = vpack.c.bf16 %v1238, %v1238
      %s1244 = scalar_lea.vmem %s199, 36
      %v1245 = vld [vmem:[%s1244] sm:$0xf]
      %v1247 = vsel %vm241, %v1239, 0
      %v1250 = vsel %vm241, %v1240, 0
      %v1253 = vsel %vm241, %v1241, 0
      %v1256 = vsel %vm241, %v1242, 0
      %v1259 = vsel %vm241, %v1243, 0
      %v1262 = vsel %vm257, %v1245, 0
      %1264 = vmatprep.subr.bf16.mxu0 0
      %1265 = vmatpush1.bf16.msra.mxu0 0
      %1266 = vmatprep.subr.bf16.mxu0 0
      %1267 = vmatpush1.bf16.msra.mxu0 0
      %1268 = vmatprep.subr.bf16.mxu0 0
      %1269 = vmatpush1.bf16.msra.mxu0 0
      %1270 = vmatprep.subr.bf16.mxu0 0
      %1271 = vmatpush1.bf16.msra.mxu0 0
      %1272 = vmatprep.subr.bf16.mxu0 0
      %1273 = vmatpush1.bf16.msra.mxu0 0
      %1274 = vmatprep.subr.bf16.mxu0 0
      %1275 = vmatpush1.bf16.msra.mxu0 0
      %1276 = vmatprep.subr.bf16.mxu0 0
      %1277 = vmatpush1.bf16.msra.mxu0 0
      %1278 = vmatprep.subr.bf16.mxu0 0
      %1279 = vmatpush1.bf16.msra.mxu0 %v1262
      %1280 = vmatprep.subr.bf16.mxu0 0
      %1281 = vmatpush2.bf16.msra.mxu0 0
      %1282 = vmatprep.subr.bf16.mxu0 0
      %1283 = vmatpush2.bf16.msra.mxu0 0
      %1284 = vmatprep.subr.bf16.mxu0 0
      %1285 = vmatpush2.bf16.msra.mxu0 0
      %1286 = vmatprep.subr.bf16.mxu0 0
      %1287 = vmatpush2.bf16.msra.mxu0 0
      %1288 = vmatprep.subr.bf16.mxu0 0
      %1289 = vmatpush2.bf16.msra.mxu0 0
      %1290 = vmatprep.subr.bf16.mxu0 0
      %1291 = vmatpush2.bf16.msra.mxu0 0
      %1292 = vmatprep.subr.bf16.mxu0 0
      %1293 = vmatpush2.bf16.msra.mxu0 0
      %1294 = vmatprep.subr.bf16.mxu0 0
      %1295 = vmatpush2.bf16.msra.mxu0 0
      %1296 = vmatprep.mubr.bf16.mxu0 0
      %1297 = vmatmul.mubr.bf16.gmra.mxu0 %v1247
      %v1298 = vpop.f32.mrf.mxu0
      %v1299 = vadd.f32 0.0, %v1298
      %v1300 = vpop.f32.mrf.mxu0
      %v1301 = vpop.f32.mrf.mxu0
      %v1302 = vadd.f32 0.0, %v1301
      %v1303 = vpop.f32.mrf.mxu0
      %1304 = vmatprep.mubr.bf16.mxu0 0
      %1305 = vmatmul.mubr.bf16.gmra.mxu0 %v1250
      %v1306 = vpop.f32.mrf.mxu0
      %v1307 = vadd.f32 0.0, %v1306
      %v1308 = vpop.f32.mrf.mxu0
      %v1309 = vpop.f32.mrf.mxu0
      %v1310 = vadd.f32 0.0, %v1309
      %v1311 = vpop.f32.mrf.mxu0
      %1312 = vmatprep.mubr.bf16.mxu0 0
      %1313 = vmatmul.mubr.bf16.gmra.mxu0 %v1253
      %v1314 = vpop.f32.mrf.mxu0
      %v1315 = vadd.f32 0.0, %v1314
      %v1316 = vpop.f32.mrf.mxu0
      %v1317 = vpop.f32.mrf.mxu0
      %v1318 = vadd.f32 0.0, %v1317
      %v1319 = vpop.f32.mrf.mxu0
      %1320 = vmatprep.mubr.bf16.mxu0 0
      %1321 = vmatmul.mubr.bf16.gmra.mxu0 %v1256
      %v1322 = vpop.f32.mrf.mxu0
      %v1323 = vadd.f32 0.0, %v1322
      %v1324 = vpop.f32.mrf.mxu0
      %v1325 = vpop.f32.mrf.mxu0
      %v1326 = vadd.f32 0.0, %v1325
      %v1327 = vpop.f32.mrf.mxu0
      %1328 = vmatprep.mubr.bf16.mxu0 0
      %1329 = vmatmul.mubr.bf16.gmra.mxu0 %v1259
      %v1330 = vpop.f32.mrf.mxu0
      %v1331 = vadd.f32 0.0, %v1330
      %v1332 = vpop.f32.mrf.mxu0
      %v1333 = vpop.f32.mrf.mxu0
      %v1334 = vpop.f32.mrf.mxu0
      %1335 = vdwg.mxu0
      %v1336 = vadd.f32 %v1221, %v1299
      %v1337 = vadd.f32 %v1222, %v1302
      %v1338 = vadd.f32 %v1223, %v1307
      %v1339 = vadd.f32 %v1224, %v1310
      %v1340 = vadd.f32 %v1225, %v1315
      %v1341 = vadd.f32 %v1226, %v1318
      %v1342 = vadd.f32 %v1227, %v1323
      %v1343 = vadd.f32 %v1228, %v1326
      %v1344 = vadd.f32 %v1229, %v1331
      %v1345 = vld [vmem:[%s195 + $0xa] sm:$0xff]
      %v1346 = vld [vmem:[%s195 + $0x12] sm:$0xff]
      %v1347 = vld [vmem:[%s195 + $0x1a] sm:$0xff]
      %v1348 = vld [vmem:[%s195 + $0x22] sm:$0xff]
      %v1349 = vld [vmem:[%s195 + $0x2a] sm:$0xff]
      %v1350 = vld [vmem:[%s195 + $0x32] sm:$0xff]
      %v1351 = vld [vmem:[%s195 + $0x3a] sm:$0xff]
      %v1352 = vld [vmem:[%s195 + $0x42] sm:$0xff]
      %v1353 = vld [vmem:[%s195 + $0x4a] sm:$0xff]
      %v1354 = vpack.c.bf16 %v1346, %v1345
      %v1355 = vpack.c.bf16 %v1348, %v1347
      %v1356 = vpack.c.bf16 %v1350, %v1349
      %v1357 = vpack.c.bf16 %v1352, %v1351
      %v1358 = vpack.c.bf16 %v1353, %v1353
      %s1359 = scalar_lea.vmem %s199, 40
      %v1360 = vld [vmem:[%s1359] sm:$0xf]
      %v1362 = vsel %vm241, %v1354, 0
      %v1365 = vsel %vm241, %v1355, 0
      %v1368 = vsel %vm241, %v1356, 0
      %v1371 = vsel %vm241, %v1357, 0
      %v1374 = vsel %vm241, %v1358, 0
      %v1377 = vsel %vm257, %v1360, 0
      %1379 = vmatprep.subr.bf16.mxu0 0
      %1380 = vmatpush1.bf16.msra.mxu0 0
      %1381 = vmatprep.subr.bf16.mxu0 0
      %1382 = vmatpush1.bf16.msra.mxu0 0
      %1383 = vmatprep.subr.bf16.mxu0 0
      %1384 = vmatpush1.bf16.msra.mxu0 0
      %1385 = vmatprep.subr.bf16.mxu0 0
      %1386 = vmatpush1.bf16.msra.mxu0 0
      %1387 = vmatprep.subr.bf16.mxu0 0
      %1388 = vmatpush1.bf16.msra.mxu0 0
      %1389 = vmatprep.subr.bf16.mxu0 0
      %1390 = vmatpush1.bf16.msra.mxu0 0
      %1391 = vmatprep.subr.bf16.mxu0 0
      %1392 = vmatpush1.bf16.msra.mxu0 0
      %1393 = vmatprep.subr.bf16.mxu0 0
      %1394 = vmatpush1.bf16.msra.mxu0 %v1377
      %1395 = vmatprep.subr.bf16.mxu0 0
      %1396 = vmatpush2.bf16.msra.mxu0 0
      %1397 = vmatprep.subr.bf16.mxu0 0
      %1398 = vmatpush2.bf16.msra.mxu0 0
      %1399 = vmatprep.subr.bf16.mxu0 0
      %1400 = vmatpush2.bf16.msra.mxu0 0
      %1401 = vmatprep.subr.bf16.mxu0 0
      %1402 = vmatpush2.bf16.msra.mxu0 0
      %1403 = vmatprep.subr.bf16.mxu0 0
      %1404 = vmatpush2.bf16.msra.mxu0 0
      %1405 = vmatprep.subr.bf16.mxu0 0
      %1406 = vmatpush2.bf16.msra.mxu0 0
      %1407 = vmatprep.subr.bf16.mxu0 0
      %1408 = vmatpush2.bf16.msra.mxu0 0
      %1409 = vmatprep.subr.bf16.mxu0 0
      %1410 = vmatpush2.bf16.msra.mxu0 0
      %1411 = vmatprep.mubr.bf16.mxu0 0
      %1412 = vmatmul.mubr.bf16.gmra.mxu0 %v1362
      %v1413 = vpop.f32.mrf.mxu0
      %v1414 = vadd.f32 0.0, %v1413
      %v1415 = vpop.f32.mrf.mxu0
      %v1416 = vpop.f32.mrf.mxu0
      %v1417 = vadd.f32 0.0, %v1416
      %v1418 = vpop.f32.mrf.mxu0
      %1419 = vmatprep.mubr.bf16.mxu0 0
      %1420 = vmatmul.mubr.bf16.gmra.mxu0 %v1365
      %v1421 = vpop.f32.mrf.mxu0
      %v1422 = vadd.f32 0.0, %v1421
      %v1423 = vpop.f32.mrf.mxu0
      %v1424 = vpop.f32.mrf.mxu0
      %v1425 = vadd.f32 0.0, %v1424
      %v1426 = vpop.f32.mrf.mxu0
      %1427 = vmatprep.mubr.bf16.mxu0 0
      %1428 = vmatmul.mubr.bf16.gmra.mxu0 %v1368
      %v1429 = vpop.f32.mrf.mxu0
      %v1430 = vadd.f32 0.0, %v1429
      %v1431 = vpop.f32.mrf.mxu0
      %v1432 = vpop.f32.mrf.mxu0
      %v1433 = vadd.f32 0.0, %v1432
      %v1434 = vpop.f32.mrf.mxu0
      %1435 = vmatprep.mubr.bf16.mxu0 0
      %1436 = vmatmul.mubr.bf16.gmra.mxu0 %v1371
      %v1437 = vpop.f32.mrf.mxu0
      %v1438 = vadd.f32 0.0, %v1437
      %v1439 = vpop.f32.mrf.mxu0
      %v1440 = vpop.f32.mrf.mxu0
      %v1441 = vadd.f32 0.0, %v1440
      %v1442 = vpop.f32.mrf.mxu0
      %1443 = vmatprep.mubr.bf16.mxu0 0
      %1444 = vmatmul.mubr.bf16.gmra.mxu0 %v1374
      %v1445 = vpop.f32.mrf.mxu0
      %v1446 = vadd.f32 0.0, %v1445
      %v1447 = vpop.f32.mrf.mxu0
      %v1448 = vpop.f32.mrf.mxu0
      %v1449 = vpop.f32.mrf.mxu0
      %1450 = vdwg.mxu0
      %v1451 = vadd.f32 %v1336, %v1414
      %v1452 = vadd.f32 %v1337, %v1417
      %v1453 = vadd.f32 %v1338, %v1422
      %v1454 = vadd.f32 %v1339, %v1425
      %v1455 = vadd.f32 %v1340, %v1430
      %v1456 = vadd.f32 %v1341, %v1433
      %v1457 = vadd.f32 %v1342, %v1438
      %v1458 = vadd.f32 %v1343, %v1441
      %v1459 = vadd.f32 %v1344, %v1446
      %v1460 = vld [vmem:[%s224 + $0xa] sm:$0xff]
      %v1461 = vld [vmem:[%s224 + $0x12] sm:$0xff]
      %v1462 = vld [vmem:[%s224 + $0x1a] sm:$0xff]
      %v1463 = vld [vmem:[%s224 + $0x22] sm:$0xff]
      %v1464 = vld [vmem:[%s224 + $0x2a] sm:$0xff]
      %v1465 = vld [vmem:[%s224 + $0x32] sm:$0xff]
      %v1466 = vld [vmem:[%s224 + $0x3a] sm:$0xff]
      %v1467 = vld [vmem:[%s224 + $0x42] sm:$0xff]
      %v1468 = vld [vmem:[%s224 + $0x4a] sm:$0xff]
      %v1469 = vpack.c.bf16 %v1461, %v1460
      %v1470 = vpack.c.bf16 %v1463, %v1462
      %v1471 = vpack.c.bf16 %v1465, %v1464
      %v1472 = vpack.c.bf16 %v1467, %v1466
      %v1473 = vpack.c.bf16 %v1468, %v1468
      %s1474 = scalar_lea.vmem %s199, 44
      %v1475 = vld [vmem:[%s1474] sm:$0xf]
      %v1477 = vsel %vm241, %v1469, 0
      %v1480 = vsel %vm241, %v1470, 0
      %v1483 = vsel %vm241, %v1471, 0
      %v1486 = vsel %vm241, %v1472, 0
      %v1489 = vsel %vm241, %v1473, 0
      %v1492 = vsel %vm257, %v1475, 0
      %1494 = vmatprep.subr.bf16.mxu0 0
      %1495 = vmatpush1.bf16.msra.mxu0 0
      %1496 = vmatprep.subr.bf16.mxu0 0
      %1497 = vmatpush1.bf16.msra.mxu0 0
      %1498 = vmatprep.subr.bf16.mxu0 0
      %1499 = vmatpush1.bf16.msra.mxu0 0
      %1500 = vmatprep.subr.bf16.mxu0 0
      %1501 = vmatpush1.bf16.msra.mxu0 0
      %1502 = vmatprep.subr.bf16.mxu0 0
      %1503 = vmatpush1.bf16.msra.mxu0 0
      %1504 = vmatprep.subr.bf16.mxu0 0
      %1505 = vmatpush1.bf16.msra.mxu0 0
      %1506 = vmatprep.subr.bf16.mxu0 0
      %1507 = vmatpush1.bf16.msra.mxu0 0
      %1508 = vmatprep.subr.bf16.mxu0 0
      %1509 = vmatpush1.bf16.msra.mxu0 %v1492
      %1510 = vmatprep.subr.bf16.mxu0 0
      %1511 = vmatpush2.bf16.msra.mxu0 0
      %1512 = vmatprep.subr.bf16.mxu0 0
      %1513 = vmatpush2.bf16.msra.mxu0 0
      %1514 = vmatprep.subr.bf16.mxu0 0
      %1515 = vmatpush2.bf16.msra.mxu0 0
      %1516 = vmatprep.subr.bf16.mxu0 0
      %1517 = vmatpush2.bf16.msra.mxu0 0
      %1518 = vmatprep.subr.bf16.mxu0 0
      %1519 = vmatpush2.bf16.msra.mxu0 0
      %1520 = vmatprep.subr.bf16.mxu0 0
      %1521 = vmatpush2.bf16.msra.mxu0 0
      %1522 = vmatprep.subr.bf16.mxu0 0
      %1523 = vmatpush2.bf16.msra.mxu0 0
      %1524 = vmatprep.subr.bf16.mxu0 0
      %1525 = vmatpush2.bf16.msra.mxu0 0
      %1526 = vmatprep.mubr.bf16.mxu0 0
      %1527 = vmatmul.mubr.bf16.gmra.mxu0 %v1477
      %v1528 = vpop.f32.mrf.mxu0
      %v1529 = vadd.f32 0.0, %v1528
      %v1530 = vpop.f32.mrf.mxu0
      %v1531 = vpop.f32.mrf.mxu0
      %v1532 = vadd.f32 0.0, %v1531
      %v1533 = vpop.f32.mrf.mxu0
      %1534 = vmatprep.mubr.bf16.mxu0 0
      %1535 = vmatmul.mubr.bf16.gmra.mxu0 %v1480
      %v1536 = vpop.f32.mrf.mxu0
      %v1537 = vadd.f32 0.0, %v1536
      %v1538 = vpop.f32.mrf.mxu0
      %v1539 = vpop.f32.mrf.mxu0
      %v1540 = vadd.f32 0.0, %v1539
      %v1541 = vpop.f32.mrf.mxu0
      %1542 = vmatprep.mubr.bf16.mxu0 0
      %1543 = vmatmul.mubr.bf16.gmra.mxu0 %v1483
      %v1544 = vpop.f32.mrf.mxu0
      %v1545 = vadd.f32 0.0, %v1544
      %v1546 = vpop.f32.mrf.mxu0
      %v1547 = vpop.f32.mrf.mxu0
      %v1548 = vadd.f32 0.0, %v1547
      %v1549 = vpop.f32.mrf.mxu0
      %1550 = vmatprep.mubr.bf16.mxu0 0
      %1551 = vmatmul.mubr.bf16.gmra.mxu0 %v1486
      %v1552 = vpop.f32.mrf.mxu0
      %v1553 = vadd.f32 0.0, %v1552
      %v1554 = vpop.f32.mrf.mxu0
      %v1555 = vpop.f32.mrf.mxu0
      %v1556 = vadd.f32 0.0, %v1555
      %v1557 = vpop.f32.mrf.mxu0
      %1558 = vmatprep.mubr.bf16.mxu0 0
      %1559 = vmatmul.mubr.bf16.gmra.mxu0 %v1489
      %v1560 = vpop.f32.mrf.mxu0
      %v1561 = vadd.f32 0.0, %v1560
      %v1562 = vpop.f32.mrf.mxu0
      %v1563 = vpop.f32.mrf.mxu0
      %v1564 = vpop.f32.mrf.mxu0
      %1565 = vdwg.mxu0
      %v1566 = vadd.f32 %v1451, %v1529
      %v1567 = vadd.f32 %v1452, %v1532
      %v1568 = vadd.f32 %v1453, %v1537
      %v1569 = vadd.f32 %v1454, %v1540
      %v1570 = vadd.f32 %v1455, %v1545
      %v1571 = vadd.f32 %v1456, %v1548
      %v1572 = vadd.f32 %v1457, %v1553
      %v1573 = vadd.f32 %v1458, %v1556
      %v1574 = vadd.f32 %v1459, %v1561
      %v1575 = vld [vmem:[%s653 + $0x9] sm:$0xff]
      %v1576 = vld [vmem:[%s653 + $0x11] sm:$0xff]
      %v1577 = vld [vmem:[%s653 + $0x19] sm:$0xff]
      %v1578 = vld [vmem:[%s653 + $0x21] sm:$0xff]
      %v1579 = vld [vmem:[%s653 + $0x29] sm:$0xff]
      %v1580 = vld [vmem:[%s653 + $0x31] sm:$0xff]
      %v1581 = vld [vmem:[%s653 + $0x39] sm:$0xff]
      %v1582 = vld [vmem:[%s653 + $0x41] sm:$0xff]
      %v1583 = vld [vmem:[%s653 + $0x49] sm:$0xff]
      %v1584 = vpack.c.bf16 %v1576, %v1575
      %v1585 = vpack.c.bf16 %v1578, %v1577
      %v1586 = vpack.c.bf16 %v1580, %v1579
      %v1587 = vpack.c.bf16 %v1582, %v1581
      %v1588 = vpack.c.bf16 %v1583, %v1583
      %s1589 = scalar_lea.vmem %s199, 48
      %v1590 = vld [vmem:[%s1589] sm:$0xf]
      %v1592 = vsel %vm241, %v1584, 0
      %v1595 = vsel %vm241, %v1585, 0
      %v1598 = vsel %vm241, %v1586, 0
      %v1601 = vsel %vm241, %v1587, 0
      %v1604 = vsel %vm241, %v1588, 0
      %v1607 = vsel %vm257, %v1590, 0
      %1609 = vmatprep.subr.bf16.mxu0 0
      %1610 = vmatpush1.bf16.msra.mxu0 0
      %1611 = vmatprep.subr.bf16.mxu0 0
      %1612 = vmatpush1.bf16.msra.mxu0 0
      %1613 = vmatprep.subr.bf16.mxu0 0
      %1614 = vmatpush1.bf16.msra.mxu0 0
      %1615 = vmatprep.subr.bf16.mxu0 0
      %1616 = vmatpush1.bf16.msra.mxu0 0
      %1617 = vmatprep.subr.bf16.mxu0 0
      %1618 = vmatpush1.bf16.msra.mxu0 0
      %1619 = vmatprep.subr.bf16.mxu0 0
      %1620 = vmatpush1.bf16.msra.mxu0 0
      %1621 = vmatprep.subr.bf16.mxu0 0
      %1622 = vmatpush1.bf16.msra.mxu0 0
      %1623 = vmatprep.subr.bf16.mxu0 0
      %1624 = vmatpush1.bf16.msra.mxu0 %v1607
      %1625 = vmatprep.subr.bf16.mxu0 0
      %1626 = vmatpush2.bf16.msra.mxu0 0
      %1627 = vmatprep.subr.bf16.mxu0 0
      %1628 = vmatpush2.bf16.msra.mxu0 0
      %1629 = vmatprep.subr.bf16.mxu0 0
      %1630 = vmatpush2.bf16.msra.mxu0 0
      %1631 = vmatprep.subr.bf16.mxu0 0
      %1632 = vmatpush2.bf16.msra.mxu0 0
      %1633 = vmatprep.subr.bf16.mxu0 0
      %1634 = vmatpush2.bf16.msra.mxu0 0
      %1635 = vmatprep.subr.bf16.mxu0 0
      %1636 = vmatpush2.bf16.msra.mxu0 0
      %1637 = vmatprep.subr.bf16.mxu0 0
      %1638 = vmatpush2.bf16.msra.mxu0 0
      %1639 = vmatprep.subr.bf16.mxu0 0
      %1640 = vmatpush2.bf16.msra.mxu0 0
      %1641 = vmatprep.mubr.bf16.mxu0 0
      %1642 = vmatmul.mubr.bf16.gmra.mxu0 %v1592
      %v1643 = vpop.f32.mrf.mxu0
      %v1644 = vadd.f32 0.0, %v1643
      %v1645 = vpop.f32.mrf.mxu0
      %v1646 = vpop.f32.mrf.mxu0
      %v1647 = vadd.f32 0.0, %v1646
      %v1648 = vpop.f32.mrf.mxu0
      %1649 = vmatprep.mubr.bf16.mxu0 0
      %1650 = vmatmul.mubr.bf16.gmra.mxu0 %v1595
      %v1651 = vpop.f32.mrf.mxu0
      %v1652 = vadd.f32 0.0, %v1651
      %v1653 = vpop.f32.mrf.mxu0
      %v1654 = vpop.f32.mrf.mxu0
      %v1655 = vadd.f32 0.0, %v1654
      %v1656 = vpop.f32.mrf.mxu0
      %1657 = vmatprep.mubr.bf16.mxu0 0
      %1658 = vmatmul.mubr.bf16.gmra.mxu0 %v1598
      %v1659 = vpop.f32.mrf.mxu0
      %v1660 = vadd.f32 0.0, %v1659
      %v1661 = vpop.f32.mrf.mxu0
      %v1662 = vpop.f32.mrf.mxu0
      %v1663 = vadd.f32 0.0, %v1662
      %v1664 = vpop.f32.mrf.mxu0
      %1665 = vmatprep.mubr.bf16.mxu0 0
      %1666 = vmatmul.mubr.bf16.gmra.mxu0 %v1601
      %v1667 = vpop.f32.mrf.mxu0
      %v1668 = vadd.f32 0.0, %v1667
      %v1669 = vpop.f32.mrf.mxu0
      %v1670 = vpop.f32.mrf.mxu0
      %v1671 = vadd.f32 0.0, %v1670
      %v1672 = vpop.f32.mrf.mxu0
      %1673 = vmatprep.mubr.bf16.mxu0 0
      %1674 = vmatmul.mubr.bf16.gmra.mxu0 %v1604
      %v1675 = vpop.f32.mrf.mxu0
      %v1676 = vadd.f32 0.0, %v1675
      %v1677 = vpop.f32.mrf.mxu0
      %v1678 = vpop.f32.mrf.mxu0
      %v1679 = vpop.f32.mrf.mxu0
      %1680 = vdwg.mxu0
      %v1681 = vadd.f32 %v1566, %v1644
      %v1682 = vadd.f32 %v1567, %v1647
      %v1683 = vadd.f32 %v1568, %v1652
      %v1684 = vadd.f32 %v1569, %v1655
      %v1685 = vadd.f32 %v1570, %v1660
      %v1686 = vadd.f32 %v1571, %v1663
      %v1687 = vadd.f32 %v1572, %v1668
      %v1688 = vadd.f32 %v1573, %v1671
      %v1689 = vadd.f32 %v1574, %v1676
      %v1690 = vld [vmem:[%s769 + $0x9] sm:$0xff]
      %v1691 = vld [vmem:[%s769 + $0x11] sm:$0xff]
      %v1692 = vld [vmem:[%s769 + $0x19] sm:$0xff]
      %v1693 = vld [vmem:[%s769 + $0x21] sm:$0xff]
      %v1694 = vld [vmem:[%s769 + $0x29] sm:$0xff]
      %v1695 = vld [vmem:[%s769 + $0x31] sm:$0xff]
      %v1696 = vld [vmem:[%s769 + $0x39] sm:$0xff]
      %v1697 = vld [vmem:[%s769 + $0x41] sm:$0xff]
      %v1698 = vld [vmem:[%s769 + $0x49] sm:$0xff]
      %v1699 = vpack.c.bf16 %v1691, %v1690
      %v1700 = vpack.c.bf16 %v1693, %v1692
      %v1701 = vpack.c.bf16 %v1695, %v1694
      %v1702 = vpack.c.bf16 %v1697, %v1696
      %v1703 = vpack.c.bf16 %v1698, %v1698
      %s1704 = scalar_lea.vmem %s199, 52
      %v1705 = vld [vmem:[%s1704] sm:$0xf]
      %v1707 = vsel %vm241, %v1699, 0
      %v1710 = vsel %vm241, %v1700, 0
      %v1713 = vsel %vm241, %v1701, 0
      %v1716 = vsel %vm241, %v1702, 0
      %v1719 = vsel %vm241, %v1703, 0
      %v1722 = vsel %vm257, %v1705, 0
      %1724 = vmatprep.subr.bf16.mxu0 0
      %1725 = vmatpush1.bf16.msra.mxu0 0
      %1726 = vmatprep.subr.bf16.mxu0 0
      %1727 = vmatpush1.bf16.msra.mxu0 0
      %1728 = vmatprep.subr.bf16.mxu0 0
      %1729 = vmatpush1.bf16.msra.mxu0 0
      %1730 = vmatprep.subr.bf16.mxu0 0
      %1731 = vmatpush1.bf16.msra.mxu0 0
      %1732 = vmatprep.subr.bf16.mxu0 0
      %1733 = vmatpush1.bf16.msra.mxu0 0
      %1734 = vmatprep.subr.bf16.mxu0 0
      %1735 = vmatpush1.bf16.msra.mxu0 0
      %1736 = vmatprep.subr.bf16.mxu0 0
      %1737 = vmatpush1.bf16.msra.mxu0 0
      %1738 = vmatprep.subr.bf16.mxu0 0
      %1739 = vmatpush1.bf16.msra.mxu0 %v1722
      %1740 = vmatprep.subr.bf16.mxu0 0
      %1741 = vmatpush2.bf16.msra.mxu0 0
      %1742 = vmatprep.subr.bf16.mxu0 0
      %1743 = vmatpush2.bf16.msra.mxu0 0
      %1744 = vmatprep.subr.bf16.mxu0 0
      %1745 = vmatpush2.bf16.msra.mxu0 0
      %1746 = vmatprep.subr.bf16.mxu0 0
      %1747 = vmatpush2.bf16.msra.mxu0 0
      %1748 = vmatprep.subr.bf16.mxu0 0
      %1749 = vmatpush2.bf16.msra.mxu0 0
      %1750 = vmatprep.subr.bf16.mxu0 0
      %1751 = vmatpush2.bf16.msra.mxu0 0
      %1752 = vmatprep.subr.bf16.mxu0 0
      %1753 = vmatpush2.bf16.msra.mxu0 0
      %1754 = vmatprep.subr.bf16.mxu0 0
      %1755 = vmatpush2.bf16.msra.mxu0 0
      %1756 = vmatprep.mubr.bf16.mxu0 0
      %1757 = vmatmul.mubr.bf16.gmra.mxu0 %v1707
      %v1758 = vpop.f32.mrf.mxu0
      %v1759 = vadd.f32 0.0, %v1758
      %v1760 = vpop.f32.mrf.mxu0
      %v1761 = vpop.f32.mrf.mxu0
      %v1762 = vadd.f32 0.0, %v1761
      %v1763 = vpop.f32.mrf.mxu0
      %1764 = vmatprep.mubr.bf16.mxu0 0
      %1765 = vmatmul.mubr.bf16.gmra.mxu0 %v1710
      %v1766 = vpop.f32.mrf.mxu0
      %v1767 = vadd.f32 0.0, %v1766
      %v1768 = vpop.f32.mrf.mxu0
      %v1769 = vpop.f32.mrf.mxu0
      %v1770 = vadd.f32 0.0, %v1769
      %v1771 = vpop.f32.mrf.mxu0
      %1772 = vmatprep.mubr.bf16.mxu0 0
      %1773 = vmatmul.mubr.bf16.gmra.mxu0 %v1713
      %v1774 = vpop.f32.mrf.mxu0
      %v1775 = vadd.f32 0.0, %v1774
      %v1776 = vpop.f32.mrf.mxu0
      %v1777 = vpop.f32.mrf.mxu0
      %v1778 = vadd.f32 0.0, %v1777
      %v1779 = vpop.f32.mrf.mxu0
      %1780 = vmatprep.mubr.bf16.mxu0 0
      %1781 = vmatmul.mubr.bf16.gmra.mxu0 %v1716
      %v1782 = vpop.f32.mrf.mxu0
      %v1783 = vadd.f32 0.0, %v1782
      %v1784 = vpop.f32.mrf.mxu0
      %v1785 = vpop.f32.mrf.mxu0
      %v1786 = vadd.f32 0.0, %v1785
      %v1787 = vpop.f32.mrf.mxu0
      %1788 = vmatprep.mubr.bf16.mxu0 0
      %1789 = vmatmul.mubr.bf16.gmra.mxu0 %v1719
      %v1790 = vpop.f32.mrf.mxu0
      %v1791 = vadd.f32 0.0, %v1790
      %v1792 = vpop.f32.mrf.mxu0
      %v1793 = vpop.f32.mrf.mxu0
      %v1794 = vpop.f32.mrf.mxu0
      %1795 = vdwg.mxu0
      %v1796 = vadd.f32 %v1681, %v1759
      %v1797 = vadd.f32 %v1682, %v1762
      %v1798 = vadd.f32 %v1683, %v1767
      %v1799 = vadd.f32 %v1684, %v1770
      %v1800 = vadd.f32 %v1685, %v1775
      %v1801 = vadd.f32 %v1686, %v1778
      %v1802 = vadd.f32 %v1687, %v1783
      %v1803 = vadd.f32 %v1688, %v1786
      %v1804 = vadd.f32 %v1689, %v1791
      %v1805 = vld [vmem:[%s653 + $0xa] sm:$0xff]
      %v1806 = vld [vmem:[%s653 + $0x12] sm:$0xff]
      %v1807 = vld [vmem:[%s653 + $0x1a] sm:$0xff]
      %v1808 = vld [vmem:[%s653 + $0x22] sm:$0xff]
      %v1809 = vld [vmem:[%s653 + $0x2a] sm:$0xff]
      %v1810 = vld [vmem:[%s653 + $0x32] sm:$0xff]
      %v1811 = vld [vmem:[%s653 + $0x3a] sm:$0xff]
      %v1812 = vld [vmem:[%s653 + $0x42] sm:$0xff]
      %v1813 = vld [vmem:[%s653 + $0x4a] sm:$0xff]
      %v1814 = vpack.c.bf16 %v1806, %v1805
      %v1815 = vpack.c.bf16 %v1808, %v1807
      %v1816 = vpack.c.bf16 %v1810, %v1809
      %v1817 = vpack.c.bf16 %v1812, %v1811
      %v1818 = vpack.c.bf16 %v1813, %v1813
      %s1819 = scalar_lea.vmem %s199, 56
      %v1820 = vld [vmem:[%s1819] sm:$0xf]
      %v1822 = vsel %vm241, %v1814, 0
      %v1825 = vsel %vm241, %v1815, 0
      %v1828 = vsel %vm241, %v1816, 0
      %v1831 = vsel %vm241, %v1817, 0
      %v1834 = vsel %vm241, %v1818, 0
      %v1837 = vsel %vm257, %v1820, 0
      %1839 = vmatprep.subr.bf16.mxu0 0
      %1840 = vmatpush1.bf16.msra.mxu0 0
      %1841 = vmatprep.subr.bf16.mxu0 0
      %1842 = vmatpush1.bf16.msra.mxu0 0
      %1843 = vmatprep.subr.bf16.mxu0 0
      %1844 = vmatpush1.bf16.msra.mxu0 0
      %1845 = vmatprep.subr.bf16.mxu0 0
      %1846 = vmatpush1.bf16.msra.mxu0 0
      %1847 = vmatprep.subr.bf16.mxu0 0
      %1848 = vmatpush1.bf16.msra.mxu0 0
      %1849 = vmatprep.subr.bf16.mxu0 0
      %1850 = vmatpush1.bf16.msra.mxu0 0
      %1851 = vmatprep.subr.bf16.mxu0 0
      %1852 = vmatpush1.bf16.msra.mxu0 0
      %1853 = vmatprep.subr.bf16.mxu0 0
      %1854 = vmatpush1.bf16.msra.mxu0 %v1837
      %1855 = vmatprep.subr.bf16.mxu0 0
      %1856 = vmatpush2.bf16.msra.mxu0 0
      %1857 = vmatprep.subr.bf16.mxu0 0
      %1858 = vmatpush2.bf16.msra.mxu0 0
      %1859 = vmatprep.subr.bf16.mxu0 0
      %1860 = vmatpush2.bf16.msra.mxu0 0
      %1861 = vmatprep.subr.bf16.mxu0 0
      %1862 = vmatpush2.bf16.msra.mxu0 0
      %1863 = vmatprep.subr.bf16.mxu0 0
      %1864 = vmatpush2.bf16.msra.mxu0 0
      %1865 = vmatprep.subr.bf16.mxu0 0
      %1866 = vmatpush2.bf16.msra.mxu0 0
      %1867 = vmatprep.subr.bf16.mxu0 0
      %1868 = vmatpush2.bf16.msra.mxu0 0
      %1869 = vmatprep.subr.bf16.mxu0 0
      %1870 = vmatpush2.bf16.msra.mxu0 0
      %1871 = vmatprep.mubr.bf16.mxu0 0
      %1872 = vmatmul.mubr.bf16.gmra.mxu0 %v1822
      %v1873 = vpop.f32.mrf.mxu0
      %v1874 = vadd.f32 0.0, %v1873
      %v1875 = vpop.f32.mrf.mxu0
      %v1876 = vpop.f32.mrf.mxu0
      %v1877 = vadd.f32 0.0, %v1876
      %v1878 = vpop.f32.mrf.mxu0
      %1879 = vmatprep.mubr.bf16.mxu0 0
      %1880 = vmatmul.mubr.bf16.gmra.mxu0 %v1825
      %v1881 = vpop.f32.mrf.mxu0
      %v1882 = vadd.f32 0.0, %v1881
      %v1883 = vpop.f32.mrf.mxu0
      %v1884 = vpop.f32.mrf.mxu0
      %v1885 = vadd.f32 0.0, %v1884
      %v1886 = vpop.f32.mrf.mxu0
      %1887 = vmatprep.mubr.bf16.mxu0 0
      %1888 = vmatmul.mubr.bf16.gmra.mxu0 %v1828
      %v1889 = vpop.f32.mrf.mxu0
      %v1890 = vadd.f32 0.0, %v1889
      %v1891 = vpop.f32.mrf.mxu0
      %v1892 = vpop.f32.mrf.mxu0
      %v1893 = vadd.f32 0.0, %v1892
      %v1894 = vpop.f32.mrf.mxu0
      %1895 = vmatprep.mubr.bf16.mxu0 0
      %1896 = vmatmul.mubr.bf16.gmra.mxu0 %v1831
      %v1897 = vpop.f32.mrf.mxu0
      %v1898 = vadd.f32 0.0, %v1897
      %v1899 = vpop.f32.mrf.mxu0
      %v1900 = vpop.f32.mrf.mxu0
      %v1901 = vadd.f32 0.0, %v1900
      %v1902 = vpop.f32.mrf.mxu0
      %1903 = vmatprep.mubr.bf16.mxu0 0
      %1904 = vmatmul.mubr.bf16.gmra.mxu0 %v1834
      %v1905 = vpop.f32.mrf.mxu0
      %v1906 = vadd.f32 0.0, %v1905
      %v1907 = vpop.f32.mrf.mxu0
      %v1908 = vpop.f32.mrf.mxu0
      %v1909 = vpop.f32.mrf.mxu0
      %1910 = vdwg.mxu0
      %v1911 = vadd.f32 %v1796, %v1874
      %v1912 = vadd.f32 %v1797, %v1877
      %v1913 = vadd.f32 %v1798, %v1882
      %v1914 = vadd.f32 %v1799, %v1885
      %v1915 = vadd.f32 %v1800, %v1890
      %v1916 = vadd.f32 %v1801, %v1893
      %v1917 = vadd.f32 %v1802, %v1898
      %v1918 = vadd.f32 %v1803, %v1901
      %v1919 = vadd.f32 %v1804, %v1906
      %v1920 = vld [vmem:[%s769 + $0xa] sm:$0xff]
      %v1921 = vld [vmem:[%s769 + $0x12] sm:$0xff]
      %v1922 = vld [vmem:[%s769 + $0x1a] sm:$0xff]
      %v1923 = vld [vmem:[%s769 + $0x22] sm:$0xff]
      %v1924 = vld [vmem:[%s769 + $0x2a] sm:$0xff]
      %v1925 = vld [vmem:[%s769 + $0x32] sm:$0xff]
      %v1926 = vld [vmem:[%s769 + $0x3a] sm:$0xff]
      %v1927 = vld [vmem:[%s769 + $0x42] sm:$0xff]
      %v1928 = vld [vmem:[%s769 + $0x4a] sm:$0xff]
      %v1929 = vpack.c.bf16 %v1921, %v1920
      %v1930 = vpack.c.bf16 %v1923, %v1922
      %v1931 = vpack.c.bf16 %v1925, %v1924
      %v1932 = vpack.c.bf16 %v1927, %v1926
      %v1933 = vpack.c.bf16 %v1928, %v1928
      %s1934 = scalar_lea.vmem %s199, 60
      %v1935 = vld [vmem:[%s1934] sm:$0xf]
      %v1937 = vsel %vm241, %v1929, 0
      %v1940 = vsel %vm241, %v1930, 0
      %v1943 = vsel %vm241, %v1931, 0
      %v1946 = vsel %vm241, %v1932, 0
      %v1949 = vsel %vm241, %v1933, 0
      %v1952 = vsel %vm257, %v1935, 0
      %1954 = vmatprep.subr.bf16.mxu0 0
      %1955 = vmatpush1.bf16.msra.mxu0 0
      %1956 = vmatprep.subr.bf16.mxu0 0
      %1957 = vmatpush1.bf16.msra.mxu0 0
      %1958 = vmatprep.subr.bf16.mxu0 0
      %1959 = vmatpush1.bf16.msra.mxu0 0
      %1960 = vmatprep.subr.bf16.mxu0 0
      %1961 = vmatpush1.bf16.msra.mxu0 0
      %1962 = vmatprep.subr.bf16.mxu0 0
      %1963 = vmatpush1.bf16.msra.mxu0 0
      %1964 = vmatprep.subr.bf16.mxu0 0
      %1965 = vmatpush1.bf16.msra.mxu0 0
      %1966 = vmatprep.subr.bf16.mxu0 0
      %1967 = vmatpush1.bf16.msra.mxu0 0
      %1968 = vmatprep.subr.bf16.mxu0 0
      %1969 = vmatpush1.bf16.msra.mxu0 %v1952
      %1970 = vmatprep.subr.bf16.mxu0 0
      %1971 = vmatpush2.bf16.msra.mxu0 0
      %1972 = vmatprep.subr.bf16.mxu0 0
      %1973 = vmatpush2.bf16.msra.mxu0 0
      %1974 = vmatprep.subr.bf16.mxu0 0
      %1975 = vmatpush2.bf16.msra.mxu0 0
      %1976 = vmatprep.subr.bf16.mxu0 0
      %1977 = vmatpush2.bf16.msra.mxu0 0
      %1978 = vmatprep.subr.bf16.mxu0 0
      %1979 = vmatpush2.bf16.msra.mxu0 0
      %1980 = vmatprep.subr.bf16.mxu0 0
      %1981 = vmatpush2.bf16.msra.mxu0 0
      %1982 = vmatprep.subr.bf16.mxu0 0
      %1983 = vmatpush2.bf16.msra.mxu0 0
      %1984 = vmatprep.subr.bf16.mxu0 0
      %1985 = vmatpush2.bf16.msra.mxu0 0
      %1986 = vmatprep.mubr.bf16.mxu0 0
      %1987 = vmatmul.mubr.bf16.gmra.mxu0 %v1937
      %v1988 = vpop.f32.mrf.mxu0
      %v1989 = vadd.f32 0.0, %v1988
      %v1990 = vpop.f32.mrf.mxu0
      %v1991 = vpop.f32.mrf.mxu0
      %v1992 = vadd.f32 0.0, %v1991
      %v1993 = vpop.f32.mrf.mxu0
      %1994 = vmatprep.mubr.bf16.mxu0 0
      %1995 = vmatmul.mubr.bf16.gmra.mxu0 %v1940
      %v1996 = vpop.f32.mrf.mxu0
      %v1997 = vadd.f32 0.0, %v1996
      %v1998 = vpop.f32.mrf.mxu0
      %v1999 = vpop.f32.mrf.mxu0
      %v2000 = vadd.f32 0.0, %v1999
      %v2001 = vpop.f32.mrf.mxu0
      %2002 = vmatprep.mubr.bf16.mxu0 0
      %2003 = vmatmul.mubr.bf16.gmra.mxu0 %v1943
      %v2004 = vpop.f32.mrf.mxu0
      %v2005 = vadd.f32 0.0, %v2004
      %v2006 = vpop.f32.mrf.mxu0
      %v2007 = vpop.f32.mrf.mxu0
      %v2008 = vadd.f32 0.0, %v2007
      %v2009 = vpop.f32.mrf.mxu0
      %2010 = vmatprep.mubr.bf16.mxu0 0
      %2011 = vmatmul.mubr.bf16.gmra.mxu0 %v1946
      %v2012 = vpop.f32.mrf.mxu0
      %v2013 = vadd.f32 0.0, %v2012
      %v2014 = vpop.f32.mrf.mxu0
      %v2015 = vpop.f32.mrf.mxu0
      %v2016 = vadd.f32 0.0, %v2015
      %v2017 = vpop.f32.mrf.mxu0
      %2018 = vmatprep.mubr.bf16.mxu0 0
      %2019 = vmatmul.mubr.bf16.gmra.mxu0 %v1949
      %v2020 = vpop.f32.mrf.mxu0
      %v2021 = vadd.f32 0.0, %v2020
      %v2022 = vpop.f32.mrf.mxu0
      %v2023 = vpop.f32.mrf.mxu0
      %v2024 = vpop.f32.mrf.mxu0
      %2025 = vdwg.mxu0
      %v2026 = vadd.f32 %v1911, %v1989
      %v2027 = vadd.f32 %v1912, %v1992
      %v2028 = vadd.f32 %v1913, %v1997
      %v2029 = vadd.f32 %v1914, %v2000
      %v2030 = vadd.f32 %v1915, %v2005
      %v2031 = vadd.f32 %v1916, %v2008
      %v2032 = vadd.f32 %v1917, %v2013
      %v2033 = vadd.f32 %v1918, %v2016
      %v2034 = vadd.f32 %v1919, %v2021
      %v2035 = vld [vmem:[%s2] sm:$0xff]
      %v2036 = vld [vmem:[%s2 + $0x8] sm:$0xff]
      %v2037 = vld [vmem:[%s2 + $0x10] sm:$0xff]
      %v2038 = vld [vmem:[%s2 + $0x18] sm:$0xff]
      %v2039 = vld [vmem:[%s2 + $0x20] sm:$0xff]
      %v2040 = vld [vmem:[%s2 + $0x28] sm:$0xff]
      %v2041 = vld [vmem:[%s2 + $0x30] sm:$0xff]
      %v2042 = vld [vmem:[%s2 + $0x38] sm:$0xff]
      %v2043 = vld [vmem:[%s2 + $0x40] sm:$0xff]
      %2045 = vset.pattern.permute.xlu0 0
      %2046 = vperm.xlu0 %2045, %v2035
      %v2047 = vpop.permute.xlu0 %2046
      %2050 = vset.pattern.permute.xlu0 0
      %2051 = vperm.xlu0 %2050, %v2036
      %v2052 = vpop.permute.xlu0 %2051
      %2055 = vset.pattern.permute.xlu0 0
      %2056 = vperm.xlu0 %2055, %v2037
      %v2057 = vpop.permute.xlu0 %2056
      %2060 = vset.pattern.permute.xlu0 0
      %2061 = vperm.xlu0 %2060, %v2038
      %v2062 = vpop.permute.xlu0 %2061
      %2065 = vset.pattern.permute.xlu0 0
      %2066 = vperm.xlu0 %2065, %v2039
      %v2067 = vpop.permute.xlu0 %2066
      %2070 = vset.pattern.permute.xlu0 0
      %2071 = vperm.xlu0 %2070, %v2040
      %v2072 = vpop.permute.xlu0 %2071
      %2075 = vset.pattern.permute.xlu0 0
      %2076 = vperm.xlu0 %2075, %v2041
      %v2077 = vpop.permute.xlu0 %2076
      %2080 = vset.pattern.permute.xlu0 0
      %2081 = vperm.xlu0 %2080, %v2042
      %v2082 = vpop.permute.xlu0 %2081
      %2085 = vset.pattern.permute.xlu0 0
      %2086 = vperm.xlu0 %2085, %v2043
      %v2087 = vpop.permute.xlu0 %2086
      %v2089 = vmul.f32 %v2026, %v2047
      %v2090 = vmul.f32 %v2027, %v2052
      %v2091 = vmul.f32 %v2028, %v2057
      %v2092 = vmul.f32 %v2029, %v2062
      %v2093 = vmul.f32 %v2030, %v2067
      %v2094 = vmul.f32 %v2031, %v2072
      %v2095 = vmul.f32 %v2032, %v2077
      %v2096 = vmul.f32 %v2033, %v2082
      %v2097 = vmul.f32 %v2034, %v2087
      %v2098 = vadd.f32 %v2089, %v2090
      %v2099 = vadd.f32 %v2098, %v2091
      %v2100 = vadd.f32 %v2099, %v2092
      %v2101 = vadd.f32 %v2100, %v2093
      %v2102 = vadd.f32 %v2101, %v2094
      %v2103 = vadd.f32 %v2102, %v2095
      %v2104 = vadd.f32 %v2103, %v2096
      %v2105 = vadd.f32 %v2104, %v2097
      %v2106 = vrot.slane %v2105, 4
      %v2107 = vadd.f32 %v2105, %v2106
      %v2108 = vrot.slane %v2107, 2
      %v2109 = vadd.f32 %v2107, %v2108
      %v2110 = vrot.slane %v2109, 1
      %v2111 = vadd.f32 %v2109, %v2110
      %v2112 = vmul.f32 %v2111, 0.015625
      %v2113 = vsub.f32 %v2026, %v2112
      %v2114 = vsub.f32 %v2027, %v2112
      %v2115 = vsub.f32 %v2028, %v2112
      %v2116 = vsub.f32 %v2029, %v2112
      %v2117 = vsub.f32 %v2030, %v2112
      %v2118 = vsub.f32 %v2031, %v2112
      %v2119 = vsub.f32 %v2032, %v2112
      %v2120 = vsub.f32 %v2033, %v2112
      %v2121 = vsub.f32 %v2034, %v2112
      %v2122 = vmul.f32 %v2113, %v2113
      %v2123 = vmul.f32 %v2114, %v2114
      %v2124 = vmul.f32 %v2115, %v2115
      %v2125 = vmul.f32 %v2116, %v2116
      %v2126 = vmul.f32 %v2117, %v2117
      %v2127 = vmul.f32 %v2118, %v2118
      %v2128 = vmul.f32 %v2119, %v2119
      %v2129 = vmul.f32 %v2120, %v2120
      %v2130 = vmul.f32 %v2121, %v2121
      %v2131 = vmul.f32 %v2122, %v2047
      %v2132 = vmul.f32 %v2123, %v2052
      %v2133 = vmul.f32 %v2124, %v2057
      %v2134 = vmul.f32 %v2125, %v2062
      %v2135 = vmul.f32 %v2126, %v2067
      %v2136 = vmul.f32 %v2127, %v2072
      %v2137 = vmul.f32 %v2128, %v2077
      %v2138 = vmul.f32 %v2129, %v2082
      %v2139 = vmul.f32 %v2130, %v2087
      %v2140 = vadd.f32 %v2131, %v2132
      %v2141 = vadd.f32 %v2140, %v2133
      %v2142 = vadd.f32 %v2141, %v2134
      %v2143 = vadd.f32 %v2142, %v2135
      %v2144 = vadd.f32 %v2143, %v2136
      %v2145 = vadd.f32 %v2144, %v2137
      %v2146 = vadd.f32 %v2145, %v2138
      %v2147 = vadd.f32 %v2146, %v2139
      %v2148 = vrot.slane %v2147, 4
      %v2149 = vadd.f32 %v2147, %v2148
      %v2150 = vrot.slane %v2149, 2
      %v2151 = vadd.f32 %v2149, %v2150
      %v2152 = vrot.slane %v2151, 1
      %v2153 = vadd.f32 %v2151, %v2152
      %v2154 = vmul.f32 %v2153, 0.015625
      %v2155 = vadd.f32 %v2154, 1e-05
      %v2156 = vrsqrt.pop %v2155
      %v2157 = vmul.f32 %v2113, %v2156
      %v2158 = vmul.f32 %v2114, %v2156
      %v2159 = vmul.f32 %v2115, %v2156
      %v2160 = vmul.f32 %v2116, %v2156
      %v2161 = vmul.f32 %v2117, %v2156
      %v2162 = vmul.f32 %v2118, %v2156
      %v2163 = vmul.f32 %v2119, %v2156
      %v2164 = vmul.f32 %v2120, %v2156
      %v2165 = vmul.f32 %v2121, %v2156
      %vm2166 = vcmp.ge.f32.partialorder %v2157, 0.0
      %vm2167 = vcmp.ge.f32.partialorder %v2158, 0.0
      %vm2168 = vcmp.ge.f32.partialorder %v2159, 0.0
      %vm2169 = vcmp.ge.f32.partialorder %v2160, 0.0
      %vm2170 = vcmp.ge.f32.partialorder %v2161, 0.0
      %vm2171 = vcmp.ge.f32.partialorder %v2162, 0.0
      %vm2172 = vcmp.ge.f32.partialorder %v2163, 0.0
      %vm2173 = vcmp.ge.f32.partialorder %v2164, 0.0
      %vm2174 = vcmp.ge.f32.partialorder %v2165, 0.0
      %v2175 = vmul.f32 %v2157, 0.2
      %v2176 = vmul.f32 %v2158, 0.2
      %v2177 = vmul.f32 %v2159, 0.2
      %v2178 = vmul.f32 %v2160, 0.2
      %v2179 = vmul.f32 %v2161, 0.2
      %v2180 = vmul.f32 %v2162, 0.2
      %v2181 = vmul.f32 %v2163, 0.2
      %v2182 = vmul.f32 %v2164, 0.2
      %v2183 = vmul.f32 %v2165, 0.2
      %v2184 = vsel %vm2166, %v2157, %v2175
      %v2185 = vsel %vm2167, %v2158, %v2176
      %v2186 = vsel %vm2168, %v2159, %v2177
      %v2187 = vsel %vm2169, %v2160, %v2178
      %v2188 = vsel %vm2170, %v2161, %v2179
      %v2189 = vsel %vm2171, %v2162, %v2180
      %v2190 = vsel %vm2172, %v2163, %v2181
      %v2191 = vsel %vm2173, %v2164, %v2182
      %v2192 = vsel %vm2174, %v2165, %v2183
      %2193 = vst [vmem:[%s207] sm:$0xff] %v2184
      %2194 = vst [vmem:[%s207 + $0x8] sm:$0xff] %v2185
      %2195 = vst [vmem:[%s207 + $0x10] sm:$0xff] %v2186
      %2196 = vst [vmem:[%s207 + $0x18] sm:$0xff] %v2187
      %2197 = vst [vmem:[%s207 + $0x20] sm:$0xff] %v2188
      %2198 = vst [vmem:[%s207 + $0x28] sm:$0xff] %v2189
      %2199 = vst [vmem:[%s207 + $0x30] sm:$0xff] %v2190
      %2200 = vst [vmem:[%s207 + $0x38] sm:$0xff] %v2191
      %2201 = vst [vmem:[%s207 + $0x40] sm:$0xff] %v2192
      %p2202 = scmp.lt.s32.totalorder %s18, 1
      %s2203 = scalar_select %p2202, %s18, 1
      %p2204 = scmp.lt.s32.totalorder %s19, 0
      %s2205 = scalar_select %p2204, %s19, 0
      %s2206 = smul.addr %s2203, 9
      %s2207 = sadd.s32 %s2205, %s2206
      %s2208 = smul.addr %s2207, 8
      %s2209 = scalar_lea.vmem %s3, %s2208
      // Predicated region
      $region33: #{block_forward.1} parent=31 // pred_check
        %p2210 = pneg %p119
      $region34: #{block_forward.1} parent=31 // pred_check_branch
        %2212 = sbr.rel (%p2210) target = $region36
      $region35: #{block_forward.1} parent=31 // pred_region
        _
      $region36: #{block_forward.1} parent=31 // pred_fallthru
        _
    $region32: #{block_forward.1} parent=5 // pred_fallthru
      _
    %p2213 = scmp.le.s32.totalorder 2, %s9
    // Predicated region
    $region37: #{block_forward.1} parent=5 // pred_check
      %p2214 = pneg %p2213
    $region38: #{block_forward.1} parent=5 // pred_check_branch
      %2216 = sbr.rel (%p2214) target = $region40
    $region39: #{block_forward.1} parent=5 // pred_region
      %s2217 = ssub.s32 %s9, 2
      // Predicated region
      $region41: #{block_forward.1} parent=39 // pred_check
        %p2218 = pneg %p125
      $region42: #{block_forward.1} parent=39 // pred_check_branch
        %2220 = sbr.rel (%p2218) target = $region44
      $region43: #{block_forward.1} parent=39 // pred_region
        %p2221 = scmp.lt.s32.totalorder %s20, 1
        %s2222 = scalar_select %p2221, %s20, 1
        %p2223 = scmp.lt.s32.totalorder %s21, 0
        %s2224 = scalar_select %p2223, %s21, 0
        %s2225 = smul.addr %s2222, 9
        %s2226 = sadd.s32 %s2224, %s2225
        %s2227 = smul.addr %s2226, 8
        %s2228 = scalar_lea.vmem %s3, %s2227
      $region44: #{block_forward.1} parent=39 // pred_fallthru
        _
    $region40: #{block_forward.1} parent=5 // pred_fallthru
      _
  $region6: #{block_forward.1} parent=0 // loop_footer
    %s13 = sadd.s32 1, %s9
  $region7: #{block_forward.1} parent=0 // loop_footer_branch
    %8 = sbr.rel target = $region3
  $region8: #{block_forward.1} parent=0 // loop_exit
    _

</llo_original>
